<compile_context>
chip_gen: v7x
topology: tpu7x:2x2x1
jax: 0.10.0
libtpu: 0.0.40
codegen_flags: <defaults>
</compile_context>

<pallas_src>
import math

import jax
import jax.numpy as jnp
from jax.experimental import pallas as pl
from jax.experimental.pallas import tpu as pltpu


_SMALL_FALLBACK_BYTES = 256 * 1024        # below this, plain XLA wins
_TILE_BUDGET_BYTES = 4 * 1024 * 1024      # data per buffer, aligned 2D path
_RAGGED_TILE_BUDGET_BYTES = 512 * 1024    # data per buffer, (1, N) ragged path
_VMEM_LIMIT_BYTES = 48 * 1024 * 1024      # 4 arrays x 2 bufs x 4 MiB + headroom


def _cross_stitch_kernel(alpha_ref, f1_ref, f2_ref, o1_ref, o2_ref):
    # alpha_ref: (2, 2) float32 in SMEM: [[a11, a12], [a21, a22]]
    f1 = f1_ref[...]
    f2 = f2_ref[...]
    dt = f1.dtype
    # Cast the mixing scalars once to the feature dtype -> native-dtype math
    # (no f32 promote / downcast-on-store for bf16 inputs).
    a11 = alpha_ref[0, 0].astype(dt)
    a12 = alpha_ref[0, 1].astype(dt)
    a21 = alpha_ref[1, 0].astype(dt)
    a22 = alpha_ref[1, 1].astype(dt)
    o1_ref[...] = a11 * f1 + a21 * f2
    o2_ref[...] = a12 * f1 + a22 * f2


def _choose_lane_width(total):
    """Largest lane width (multiple of 128) that divides `total`, else None."""
    for lanes in (4096, 2048, 1024, 512, 256, 128):
        if total % lanes == 0:
            return lanes
    return None


def _pick_tile(extent, unit, max_tile):
    """Pick (tile, grid_steps): tile is a multiple of `unit` (or == extent),
    tile <= max_tile, and we target >= 2 (preferably even) grid steps so both
    v7x TensorCores get balanced work under 'parallel' semantics."""
    if extent <= unit:
        return extent, 1              # full-extent block (always legal)
    steps = max(pl.cdiv(extent, max_tile), 2)
    if steps % 2:
        steps += 1
    tile = pl.cdiv(pl.cdiv(extent, steps), unit) * unit
    tile = max(unit, min(tile, max_tile))
    return tile, pl.cdiv(extent, tile)


def cross_stitch(feature1, feature2, a11, a12, a21, a22):
    """Cross-stitch unit. feature1/feature2: arrays of identical shape (NCHW)."""
    assert feature1.shape == feature2.shape
    assert feature1.dtype == feature2.dtype

    orig_shape = feature1.shape
    dtype = feature1.dtype
    itemsize = jnp.dtype(dtype).itemsize
    total = math.prod(orig_shape) if orig_shape else 1

    # ---- Small-input fallback: kernel fixed cost dwarfs the work ----------
    if total * itemsize < _SMALL_FALLBACK_BYTES:
        out1 = (a11 * feature1 + a21 * feature2).astype(dtype)
        out2 = (a12 * feature1 + a22 * feature2).astype(dtype)
        return out1, out2

    # Flat views of the (contiguous, row-major) inputs are free reshapes.
    f1 = feature1.reshape(-1)
    f2 = feature2.reshape(-1)

    lanes = _choose_lane_width(total)
    if lanes is not None:
        # ---- Dense (rows, lanes) slab, row-tiled ---------------------------
        rows = total // lanes
        row_align = {4: 8, 2: 16, 1: 32}.get(itemsize, 8)
        max_tile_rows = max(
            row_align,
            (_TILE_BUDGET_BYTES // (lanes * itemsize)) // row_align * row_align,
        )
        tile_rows, grid0 = _pick_tile(rows, row_align, max_tile_rows)
        slab_shape = (rows, lanes)
        block_shape = (tile_rows, lanes)
        index_map = lambda i: (i, 0)
    else:
        # ---- Ragged total: (1, total) view, no padding ---------------------
        # The last grid block is partial along lanes; Pallas masks the
        # out-of-bounds portion of the write-back, so no extra HBM traffic.
        unit = 1024
        max_tile_len = max(
            unit, (_RAGGED_TILE_BUDGET_BYTES // itemsize) // unit * unit
        )
        tile_len, grid0 = _pick_tile(total, unit, max_tile_len)
        slab_shape = (1, total)
        block_shape = (1, tile_len)
        index_map = lambda i: (0, i)

    f1 = f1.reshape(slab_shape)
    f2 = f2.reshape(slab_shape)

    # Scalar mixing coefficients, passed via SMEM (f32; cast in-kernel).
    alphas = jnp.array([[a11, a12], [a21, a22]], dtype=jnp.float32)

    cost = pl.CostEstimate(
        flops=6 * total,                       # 4 mul + 2 add per element
        transcendentals=0,
        bytes_accessed=4 * total * itemsize,   # 2 inputs + 2 outputs, one pass
    )

    out1, out2 = pl.pallas_call(
        _cross_stitch_kernel,
        out_shape=(
            jax.ShapeDtypeStruct(slab_shape, dtype),
            jax.ShapeDtypeStruct(slab_shape, dtype),
        ),
        grid_spec=pltpu.PrefetchScalarGridSpec(
            num_scalar_prefetch=0,
            grid=(grid0,),
            in_specs=[
                pl.BlockSpec(memory_space=pltpu.SMEM),   # alphas (2,2)
                pl.BlockSpec(block_shape, index_map),    # f1
                pl.BlockSpec(block_shape, index_map),    # f2
            ],
            out_specs=[
                pl.BlockSpec(block_shape, index_map),
                pl.BlockSpec(block_shape, index_map),
            ],
        ),
        compiler_params=pltpu.CompilerParams(
            dimension_semantics=("parallel",),
            vmem_limit_bytes=_VMEM_LIMIT_BYTES,
        ),
        cost_estimate=cost,
    )(alphas, f1, f2)

    # Reshapes back to NCHW are free (same element count, no slicing).
    return out1.reshape(orig_shape), out2.reshape(orig_shape)


if __name__ == "__main__":
    # Deterministic parameter init (mirrors cfg.nddr.INIT = [0.9, 0.1]):
    #   a11 = a22 = init_weights[0] = 0.9 ; a12 = a21 = init_weights[1] = 0.1
    INIT = (0.9, 0.1)
    a11 = a22 = INIT[0]
    a12 = a21 = INIT[1]

    key = jax.random.PRNGKey(0)
    k1, k2, k3, k4, k5, k6 = jax.random.split(key, 6)

    def ref(f1, f2):
        f1_32 = f1.astype(jnp.float32)
        f2_32 = f2.astype(jnp.float32)
        return (a11 * f1_32 + a21 * f2_32, a12 * f1_32 + a22 * f2_32)

    # --- 1) Small NCHW feature map (module-typical) -> fused XLA fallback ---
    shape = (2, 4, 16, 16)
    x1 = jax.random.normal(k1, shape, dtype=jnp.float32)
    x2 = jax.random.normal(k2, shape, dtype=jnp.float32)
    o1, o2 = cross_stitch(x1, x2, a11, a12, a21, a22)
    jax.block_until_ready((o1, o2))
    r1, r2 = ref(x1, x2)
    assert o1.shape == shape and o2.shape == shape
    assert jnp.allclose(o1, r1, atol=1e-6, rtol=1e-6)
    assert jnp.allclose(o2, r2, atol=1e-6, rtol=1e-6)

    # --- 2) 128-multiple slab -> tiled 2D Pallas path (>=2 grid steps) ------
    shape2 = (4, 64, 32, 32)
    y1 = jax.random.normal(k3, shape2, dtype=jnp.float32)
    y2 = jax.random.normal(k4, shape2, dtype=jnp.float32)
    p1, p2 = cross_stitch(y1, y2, a11, a12, a21, a22)
    jax.block_until_ready((p1, p2))
    s1, s2 = ref(y1, y2)
    assert p1.shape == shape2 and p2.shape == shape2
    assert jnp.allclose(p1, s1, atol=1e-6, rtol=1e-6)
    assert jnp.allclose(p2, s2, atol=1e-6, rtol=1e-6)

    # --- 3) Non-128-multiple total -> ragged (1, N) Pallas path, no pad -----
    shape3 = (3, 49, 31, 31)   # 141267 elements, not a multiple of 128
    z1 = jax.random.normal(k5, shape3, dtype=jnp.float32)
    z2 = jax.random.normal(k6, shape3, dtype=jnp.float32)
    q1, q2 = cross_stitch(z1, z2, a11, a12, a21, a22)
    jax.block_until_ready((q1, q2))
    t1, t2 = ref(z1, z2)
    assert q1.shape == shape3 and q2.shape == shape3
    assert jnp.allclose(q1, t1, atol=1e-6, rtol=1e-6)
    assert jnp.allclose(q2, t2, atol=1e-6, rtol=1e-6)

    # --- 4) bf16 inputs -> native bf16 compute inside the kernel ------------
    b1 = y1.astype(jnp.bfloat16)
    b2 = y2.astype(jnp.bfloat16)
    u1, u2 = cross_stitch(b1, b2, a11, a12, a21, a22)
    jax.block_until_ready((u1, u2))
    rb1, rb2 = ref(b1, b2)
    assert u1.dtype == jnp.bfloat16 and u2.dtype == jnp.bfloat16
    assert jnp.allclose(u1.astype(jnp.float32), rb1, atol=3e-2, rtol=3e-2)
    assert jnp.allclose(u2.astype(jnp.float32), rb2, atol=3e-2, rtol=3e-2)

    print("KERNEL_OK")
</pallas_src>

<mosaic_0001>
module attributes {stable_mosaic.version = 11 : i64} {
  func.func @_cross_stitch_kernel(%arg0: i32, %arg1: memref<2x2xf32, #tpu.memory_space<smem>>, %arg2: memref<32x4096xf32, #tpu.memory_space<vmem>>, %arg3: memref<32x4096xf32, #tpu.memory_space<vmem>>, %arg4: memref<32x4096xf32, #tpu.memory_space<vmem>>, %arg5: memref<32x4096xf32, #tpu.memory_space<vmem>>) attributes {dimension_semantics = [#tpu.dimension_semantics<parallel>], iteration_bounds = array<i64: 2>, scalar_prefetch = 0 : i64, scratch_operands = 0 : i64, tpu.core_type = #tpu.core_type<tc>, window_params = [{transform_indices = @transform_0, window_bounds = array<i64: 2, 2>}, {transform_indices = @transform_1, window_bounds = array<i64: 32, 4096>}, {transform_indices = @transform_2, window_bounds = array<i64: 32, 4096>}, {transform_indices = @transform_3, window_bounds = array<i64: 32, 4096>}, {transform_indices = @transform_4, window_bounds = array<i64: 32, 4096>}]} {
    %c0 = arith.constant 0 : index
    %c0_0 = arith.constant 0 : index
    %0 = vector.load %arg2[%c0, %c0_0] : memref<32x4096xf32, #tpu.memory_space<vmem>>, vector<32x4096xf32>
    %c0_1 = arith.constant 0 : index
    %c0_2 = arith.constant 0 : index
    %1 = vector.load %arg3[%c0_1, %c0_2] : memref<32x4096xf32, #tpu.memory_space<vmem>>, vector<32x4096xf32>
    %c0_3 = arith.constant 0 : index
    %c0_4 = arith.constant 0 : index
    %2 = memref.load %arg1[%c0_3, %c0_4] : memref<2x2xf32, #tpu.memory_space<smem>>
    %c0_5 = arith.constant 0 : index
    %c1 = arith.constant 1 : index
    %3 = memref.load %arg1[%c0_5, %c1] : memref<2x2xf32, #tpu.memory_space<smem>>
    %c1_6 = arith.constant 1 : index
    %c0_7 = arith.constant 0 : index
    %4 = memref.load %arg1[%c1_6, %c0_7] : memref<2x2xf32, #tpu.memory_space<smem>>
    %c1_8 = arith.constant 1 : index
    %c1_9 = arith.constant 1 : index
    %5 = memref.load %arg1[%c1_8, %c1_9] : memref<2x2xf32, #tpu.memory_space<smem>>
    %6 = vector.broadcast %2 : f32 to vector<32x4096xf32>
    %7 = arith.mulf %6, %0 : vector<32x4096xf32>
    %8 = vector.broadcast %4 : f32 to vector<32x4096xf32>
    %9 = arith.mulf %8, %1 : vector<32x4096xf32>
    %10 = arith.addf %7, %9 : vector<32x4096xf32>
    %c0_10 = arith.constant 0 : index
    %c0_11 = arith.constant 0 : index
    %11 = vector.load %arg4[%c0_10, %c0_11] : memref<32x4096xf32, #tpu.memory_space<vmem>>, vector<32x4096xf32>
    tpu.vector_store %arg4[%c0_10, %c0_11], %10 {strides = array<i32>} : memref<32x4096xf32, #tpu.memory_space<vmem>>, vector<32x4096xf32>,
    %12 = vector.broadcast %3 : f32 to vector<32x4096xf32>
    %13 = arith.mulf %12, %0 : vector<32x4096xf32>
    %14 = vector.broadcast %5 : f32 to vector<32x4096xf32>
    %15 = arith.mulf %14, %1 : vector<32x4096xf32>
    %16 = arith.addf %13, %15 : vector<32x4096xf32>
    %c0_12 = arith.constant 0 : index
    %c0_13 = arith.constant 0 : index
    %17 = vector.load %arg5[%c0_12, %c0_13] : memref<32x4096xf32, #tpu.memory_space<vmem>>, vector<32x4096xf32>
    tpu.vector_store %arg5[%c0_12, %c0_13], %16 {strides = array<i32>} : memref<32x4096xf32, #tpu.memory_space<vmem>>, vector<32x4096xf32>,
    return
  }
  func.func @transform_0(%arg0: i32) -> (i32, i32) {
    %c0_i32 = arith.constant 0 : i32
    %c0_i32_0 = arith.constant 0 : i32
    %c0_i32_1 = arith.constant 0 : i32
    return %c0_i32, %c0_i32_0 : i32, i32
  }
  func.func @transform_1(%arg0: i32) -> (i32, i32) {
    %c0_i32 = arith.constant 0 : i32
    %c0_i32_0 = arith.constant 0 : i32
    return %arg0, %c0_i32 : i32, i32
  }
  func.func @transform_2(%arg0: i32) -> (i32, i32) {
    %c0_i32 = arith.constant 0 : i32
    %c0_i32_0 = arith.constant 0 : i32
    return %arg0, %c0_i32 : i32, i32
  }
  func.func @transform_3(%arg0: i32) -> (i32, i32) {
    %c0_i32 = arith.constant 0 : i32
    %c0_i32_0 = arith.constant 0 : i32
    return %arg0, %c0_i32 : i32, i32
  }
  func.func @transform_4(%arg0: i32) -> (i32, i32) {
    %c0_i32 = arith.constant 0 : i32
    %c0_i32_0 = arith.constant 0 : i32
    return %arg0, %c0_i32 : i32, i32
  }
}

</mosaic_0001>

<llo_original>
// kernel: tpu_custom_call.1
$region0: #{tpu_custom_call.1}
  #allocation0 [shape = 'u32[]', space=smem, size = 0x4, offset = 0x4, fixed_abs, tag = 'smem constant byte address 0x4 - core index']
  #allocation1 [shape = 'u32[144,128]{1,0:T(1,128)}', space=vmem, size = 0x12000, scoped, tag = 'internal scratch']
  %s0 = inlined_call_operand.hbm [shape: f32[2,2], index: 0, kind: input, shape index: {}]
  %s1 = inlined_call_operand.hbm [shape: f32[64,4096], index: 1, kind: input, shape index: {}]
  %s2 = inlined_call_operand.hbm [shape: f32[64,4096], index: 2, kind: input, shape index: {}]
  %s3 = inlined_call_operand.hbm [shape: f32[64,4096], index: 3, kind: output, shape index: {0}]
  %s4 = inlined_call_operand.hbm [shape: f32[64,4096], index: 4, kind: output, shape index: {1}]
  %5 = xla_tuple %s3, %s4
  %s6 = sld [smem:[#allocation0]]
  $region65: #{tpu_custom_call.1} parent=0
    _
  %s8 = ssub.s32 1, %s6
  %s9 = scalar_select 0, %s8, %s6
  $region1: #{tpu_custom_call.1} parent=0
    #allocation2 [shape = 'u8[1024]{0}', space=smem, size = 0x400, scoped, tag = 'input window, operand 0, single buffered']
    #allocation3 [shape = 's32[2]{0}', space=sflag, size = 0x8, scoped, tag = 'scoped memory for tpu_custom_call.1']
    #allocation4 [shape = 's32[2]{0}', space=sflag, size = 0x8, scoped, tag = 'scoped memory for tpu_custom_call.1']
    #allocation5 [shape = 's32[2]{0}', space=sflag, size = 0x8, scoped, tag = 'scoped memory for tpu_custom_call.1']
    #allocation6 [shape = 'u8[1048576]{0}', space=vmem, size = 0x100000, scoped, tag = 'input window, operand 1']
    #allocation7 [shape = 'u8[1048576]{0}', space=vmem, size = 0x100000, scoped, tag = 'input window, operand 2']
    #allocation8 [shape = 's32[2]{0}', space=sflag, size = 0x8, scoped, tag = 'scoped memory for tpu_custom_call.1']
    #allocation9 [shape = 'u8[1048576]{0}', space=vmem, size = 0x100000, scoped, tag = 'output window, operand 0']
    #allocation10 [shape = 'u8[1048576]{0}', space=vmem, size = 0x100000, scoped, tag = 'output window, operand 1']
    #allocation11 [shape = 's32[2]{0}', space=sflag, size = 0x8, scoped, tag = 'scoped memory for tpu_custom_call.1']
    %10 = vsyncpa [#allocation5], 0
    %11 = vsyncpa [#allocation3], 0
    %s12 = scalar_lea.sflag [#allocation3], 1
    %13 = vsyncpa %s12, 0
    %14 = vsyncpa [#allocation8], 0
    %s15 = scalar_lea.sflag [#allocation8], 1
    %16 = vsyncpa %s15, 0
    %17 = vsyncpa [#allocation4], 0
    %s18 = scalar_lea.sflag [#allocation4], 1
    %19 = vsyncpa %s18, 0
    %20 = vsyncpa [#allocation11], 0
    %s21 = scalar_lea.sflag [#allocation11], 1
    %22 = vsyncpa %s21, 0
    loop: start=0, step=1, limit=4
    $region2: #{tpu_custom_call.1} parent=1 // loop_pre_header
      _
    $region3: #{tpu_custom_call.1} parent=1 // loop_header
      %s24 = sphi 0, %s28
      %p25 = scmp.ge.s32.totalorder %s24, 4
      %s32 = sphi 0, %s32
      %s34 = sphi 0, %s32
      %s35 = sphi 0, %s34
      %s49 = sphi 0, %s35
      %s55 = sphi 0, %s57
      %s58 = sphi 0, %s55
      %s59 = sphi 0, %s58
      %s75 = sphi 0, %s59
      %s81 = sphi 0, %s83
      %s84 = sphi 0, %s81
      %s85 = sphi 0, %s84
      %s101 = sphi 0, %s85
      %s107 = sphi 0, %s109
      %s110 = sphi 0, %s107
      %s111 = sphi 0, %s110
      %s127 = sphi 0, %s111
      %s133 = sphi 0, %s135
      %s136 = sphi 0, %s133
      %s137 = sphi 0, %s136
      %s153 = sphi 0, %s137
    $region4: #{tpu_custom_call.1} parent=1 // loop_header_branch
      %27 = sbr.rel (%p25) target = $region8
    $region5: #{tpu_custom_call.1} parent=1 // loop_body
      %s29 = ssub.s32 %s24, 1
      %s30 = ssub.s32 %s24, 2
      %s31 = sadd.s32 %s24, 1
      %s33 = sadd.s32 %s32, 1
      %p36 = scmp.eq.s32.totalorder %s24, 1
      %p37 = scmp.ne.s32.totalorder %s32, %s34
      %p38 = scmp.eq.s32.totalorder %s24, 0
      %p39 = por %p37, %p38
      %p40 = scmp.ne.s32.totalorder %s32, %s34
      %p41 = scmp.eq.s32.totalorder %s29, 1
      %p42 = por %p40, %p41
      %p43 = scmp.ne.s32.totalorder %s34, %s35
      %p44 = scmp.eq.s32.totalorder %s29, 0
      %p45 = por %p43, %p44
      %p46 = scmp.ne.s32.totalorder %s34, %s35
      %p47 = scmp.eq.s32.totalorder %s30, 1
      %p48 = por %p46, %p47
      %p50 = scmp.ne.s32.totalorder %s35, %s49
      %p51 = scmp.eq.s32.totalorder %s30, 0
      %p52 = por %p50, %p51
      %s53 = ssub.s32 %s24, %s31
      %p54 = scmp.eq.s32.totalorder %s53, 0
      %s56 = sadd.s32 %s55, 1
      %s57 = scalar_select %p54, %s55, %s56
      %p60 = pneg %p54
      %p61 = scmp.eq.s32.totalorder %s24, 1
      %p62 = por %p60, %p61
      %p63 = scmp.ne.s32.totalorder %s55, %s58
      %p64 = scmp.eq.s32.totalorder %s24, 0
      %p65 = por %p63, %p64
      %p66 = scmp.ne.s32.totalorder %s55, %s58
      %p67 = scmp.eq.s32.totalorder %s29, 1
      %p68 = por %p66, %p67
      %p69 = scmp.ne.s32.totalorder %s58, %s59
      %p70 = scmp.eq.s32.totalorder %s29, 0
      %p71 = por %p69, %p70
      %p72 = scmp.ne.s32.totalorder %s58, %s59
      %p73 = scmp.eq.s32.totalorder %s30, 1
      %p74 = por %p72, %p73
      %p76 = scmp.ne.s32.totalorder %s59, %s75
      %p77 = scmp.eq.s32.totalorder %s30, 0
      %p78 = por %p76, %p77
      %s79 = ssub.s32 %s24, %s31
      %p80 = scmp.eq.s32.totalorder %s79, 0
      %s82 = sadd.s32 %s81, 1
      %s83 = scalar_select %p80, %s81, %s82
      %p86 = pneg %p80
      %p87 = scmp.eq.s32.totalorder %s24, 1
      %p88 = por %p86, %p87
      %p89 = scmp.ne.s32.totalorder %s81, %s84
      %p90 = scmp.eq.s32.totalorder %s24, 0
      %p91 = por %p89, %p90
      %p92 = scmp.ne.s32.totalorder %s81, %s84
      %p93 = scmp.eq.s32.totalorder %s29, 1
      %p94 = por %p92, %p93
      %p95 = scmp.ne.s32.totalorder %s84, %s85
      %p96 = scmp.eq.s32.totalorder %s29, 0
      %p97 = por %p95, %p96
      %p98 = scmp.ne.s32.totalorder %s84, %s85
      %p99 = scmp.eq.s32.totalorder %s30, 1
      %p100 = por %p98, %p99
      %p102 = scmp.ne.s32.totalorder %s85, %s101
      %p103 = scmp.eq.s32.totalorder %s30, 0
      %p104 = por %p102, %p103
      %s105 = ssub.s32 %s24, %s31
      %p106 = scmp.eq.s32.totalorder %s105, 0
      %s108 = sadd.s32 %s107, 1
      %s109 = scalar_select %p106, %s107, %s108
      %p112 = pneg %p106
      %p113 = scmp.eq.s32.totalorder %s24, 1
      %p114 = por %p112, %p113
      %p115 = scmp.ne.s32.totalorder %s107, %s110
      %p116 = scmp.eq.s32.totalorder %s24, 0
      %p117 = por %p115, %p116
      %p118 = scmp.ne.s32.totalorder %s107, %s110
      %p119 = scmp.eq.s32.totalorder %s29, 1
      %p120 = por %p118, %p119
      %p121 = scmp.ne.s32.totalorder %s110, %s111
      %p122 = scmp.eq.s32.totalorder %s29, 0
      %p123 = por %p121, %p122
      %p124 = scmp.ne.s32.totalorder %s110, %s111
      %p125 = scmp.eq.s32.totalorder %s30, 1
      %p126 = por %p124, %p125
      %p128 = scmp.ne.s32.totalorder %s111, %s127
      %p129 = scmp.eq.s32.totalorder %s30, 0
      %p130 = por %p128, %p129
      %s131 = ssub.s32 %s24, %s31
      %p132 = scmp.eq.s32.totalorder %s131, 0
      %s134 = sadd.s32 %s133, 1
      %s135 = scalar_select %p132, %s133, %s134
      %p138 = pneg %p132
      %p139 = scmp.eq.s32.totalorder %s24, 1
      %p140 = por %p138, %p139
      %p141 = scmp.ne.s32.totalorder %s133, %s136
      %p142 = scmp.eq.s32.totalorder %s24, 0
      %p143 = por %p141, %p142
      %p144 = scmp.ne.s32.totalorder %s133, %s136
      %p145 = scmp.eq.s32.totalorder %s29, 1
      %p146 = por %p144, %p145
      %p147 = scmp.ne.s32.totalorder %s136, %s137
      %p148 = scmp.eq.s32.totalorder %s29, 0
      %p149 = por %p147, %p148
      %p150 = scmp.ne.s32.totalorder %s136, %s137
      %p151 = scmp.eq.s32.totalorder %s30, 1
      %p152 = por %p150, %p151
      %p154 = scmp.ne.s32.totalorder %s137, %s153
      %p155 = scmp.eq.s32.totalorder %s30, 0
      %p156 = por %p154, %p155
      %p157 = scmp.le.s32.totalorder 1, %s24
      %p158 = scmp.lt.s32.totalorder %s24, 3
      %p159 = pnand %p157, %p158
      %p160 = pneg %p159
      // Predicated region
      $region9: #{tpu_custom_call.1} parent=5 // pred_check
        _
      $region10: #{tpu_custom_call.1} parent=5 // pred_check_branch
        %162 = sbr.rel (%p159) target = $region12
      $region11: #{tpu_custom_call.1} parent=5 // pred_region
        %s163 = ssub.s32 %s24, 1
        // Predicated region
        $region13: #{tpu_custom_call.1} parent=11 // pred_check
          %p164 = pneg %p45
        $region14: #{tpu_custom_call.1} parent=11 // pred_check_branch
          %166 = sbr.rel (%p164) target = $region16
        $region15: #{tpu_custom_call.1} parent=11 // pred_region
          %s168 = ssub.s32 32, 32
          %169 = vsyncadd [#allocation5], %s168
          %172 = dma.hbm_to_smem %s0, 32, [#allocation2], [#allocation5]
        $region16: #{tpu_custom_call.1} parent=11 // pred_fallthru
          _
      $region12: #{tpu_custom_call.1} parent=5 // pred_fallthru
        _
      %p173 = scmp.lt.s32.totalorder %s24, 2
      // Predicated region
      $region17: #{tpu_custom_call.1} parent=5 // pred_check
        %p174 = pneg %p173
      $region18: #{tpu_custom_call.1} parent=5 // pred_check_branch
        %176 = sbr.rel (%p174) target = $region20
      $region19: #{tpu_custom_call.1} parent=5 // pred_region
        // Predicated region
        $region21: #{tpu_custom_call.1} parent=19 // pred_check
          %p177 = pneg %p65
        $region22: #{tpu_custom_call.1} parent=19 // pred_check_branch
          %179 = sbr.rel (%p177) target = $region24
        $region23: #{tpu_custom_call.1} parent=19 // pred_region
          %s180 = sand.u32 %s55, 1
          %s181 = scalar_lea.sflag [#allocation3], %s180
          %s182 = sand.u32 %s55, 1
          %s183 = smul.addr %s182, 1024
          %s184 = scalar_lea.vmem [#allocation6], %s183
          %s185 = smul.u32 4, %s24
          %s187 = ssub.s32 16384, 16384
          %188 = vsyncadd %s181, %s187
          %s189 = smul.addr %s185, 32
          %s190 = smul.addr %s189, 128
          %s191 = scalar_lea.hbm %s1, %s190
          %s192 = sshll.u32 %s184, 4
          %s193 = int_to_ptr.vmem [resolvable:$true] %s192
          %198 = dma.hbm_to_vmem [thread:$0]  %s191, 16384, %s193, %s181, 4096, 4096, 256
        $region24: #{tpu_custom_call.1} parent=19 // pred_fallthru
          _
        // Predicated region
        $region25: #{tpu_custom_call.1} parent=19 // pred_check
          %p199 = pneg %p91
        $region26: #{tpu_custom_call.1} parent=19 // pred_check_branch
          %201 = sbr.rel (%p199) target = $region28
        $region27: #{tpu_custom_call.1} parent=19 // pred_region
          %s202 = sand.u32 %s81, 1
          %s203 = scalar_lea.sflag [#allocation8], %s202
          %s204 = sand.u32 %s81, 1
          %s205 = smul.addr %s204, 1024
          %s206 = scalar_lea.vmem [#allocation7], %s205
          %s207 = smul.u32 4, %s24
          %s209 = ssub.s32 16384, 16384
          %210 = vsyncadd %s203, %s209
          %s211 = smul.addr %s207, 32
          %s212 = smul.addr %s211, 128
          %s213 = scalar_lea.hbm %s2, %s212
          %s214 = sshll.u32 %s206, 4
          %s215 = int_to_ptr.vmem [resolvable:$true] %s214
          %220 = dma.hbm_to_vmem [thread:$0]  %s213, 16384, %s215, %s203, 4096, 4096, 256
        $region28: #{tpu_custom_call.1} parent=19 // pred_fallthru
          _
      $region20: #{tpu_custom_call.1} parent=5 // pred_fallthru
        _
      %p221 = scmp.le.s32.totalorder 1, %s24
      %p222 = scmp.lt.s32.totalorder %s24, 3
      %p223 = pnand %p221, %p222
      %p224 = pneg %p223
      // Predicated region
      $region29: #{tpu_custom_call.1} parent=5 // pred_check
        _
      $region30: #{tpu_custom_call.1} parent=5 // pred_check_branch
        %226 = sbr.rel (%p223) target = $region32
      $region31: #{tpu_custom_call.1} parent=5 // pred_region
        %s227 = ssub.s32 %s24, 1
        // Predicated region
        $region33: #{tpu_custom_call.1} parent=31 // pred_check
          %p228 = pneg %p45
        $region34: #{tpu_custom_call.1} parent=31 // pred_check_branch
          %230 = sbr.rel (%p228) target = $region36
        $region35: #{tpu_custom_call.1} parent=31 // pred_region
          %231 = dma.done [#allocation5], 32
        $region36: #{tpu_custom_call.1} parent=31 // pred_fallthru
          _
        %s232 = sand.u32 %s58, 1
        %s233 = scalar_lea.sflag [#allocation3], %s232
        %s234 = sand.u32 %s58, 1
        %s235 = smul.addr %s234, 1024
        %s236 = scalar_lea.vmem [#allocation6], %s235
        // Predicated region
        $region37: #{tpu_custom_call.1} parent=31 // pred_check
          %p237 = pneg %p71
        $region38: #{tpu_custom_call.1} parent=31 // pred_check_branch
          %239 = sbr.rel (%p237) target = $region40
        $region39: #{tpu_custom_call.1} parent=31 // pred_region
          %240 = dma.done %s233, 16384
        $region40: #{tpu_custom_call.1} parent=31 // pred_fallthru
          _
        %s241 = sand.u32 %s84, 1
        %s242 = scalar_lea.sflag [#allocation8], %s241
        %s243 = sand.u32 %s84, 1
        %s244 = smul.addr %s243, 1024
        %s245 = scalar_lea.vmem [#allocation7], %s244
        // Predicated region
        $region41: #{tpu_custom_call.1} parent=31 // pred_check
          %p246 = pneg %p97
        $region42: #{tpu_custom_call.1} parent=31 // pred_check_branch
          %248 = sbr.rel (%p246) target = $region44
        $region43: #{tpu_custom_call.1} parent=31 // pred_region
          %249 = dma.done %s242, 16384
        $region44: #{tpu_custom_call.1} parent=31 // pred_fallthru
          _
        %250 = sfence
        %p251 = pneg %p45
        %p252 = pneg %p42
        %s253 = sand.u32 %s58, 1
        %s254 = scalar_lea.sflag [#allocation3], %s253
        %s255 = sand.u32 %s58, 1
        %s256 = smul.addr %s255, 1024
        %s257 = scalar_lea.vmem [#allocation6], %s256
        %p258 = pneg %p71
        %p259 = pneg %p68
        %s260 = sand.u32 %s84, 1
        %s261 = scalar_lea.sflag [#allocation8], %s260
        %s262 = sand.u32 %s84, 1
        %s263 = smul.addr %s262, 1024
        %s264 = scalar_lea.vmem [#allocation7], %s263
        %p265 = pneg %p97
        %p266 = pneg %p94
        %p267 = pneg %p123
        %p268 = pneg %p120
        %s269 = sand.u32 %s110, 1
        %s270 = scalar_lea.sflag [#allocation4], %s269
        %s271 = sand.u32 %s110, 1
        %s272 = smul.addr %s271, 1024
        %s273 = scalar_lea.vmem [#allocation9], %s272
        %p274 = pneg %p149
        %p275 = pneg %p146
        %s276 = sand.u32 %s136, 1
        %s277 = scalar_lea.sflag [#allocation11], %s276
        %s278 = sand.u32 %s136, 1
        %s279 = smul.addr %s278, 1024
        %s280 = scalar_lea.vmem [#allocation10], %s279
        %s281 = smul.u32 4, %s29
        %s282 = smul.u32 4, %s29
        %s283 = smul.u32 4, %s29
        %s284 = smul.u32 4, %s29
        %v285 = vld [vmem:[%s236] sm:$0xff]
        %v286 = vld [vmem:[%s236 + $0x8] sm:$0xff]
        %v287 = vld [vmem:[%s236 + $0x10] sm:$0xff]
        %v288 = vld [vmem:[%s236 + $0x18] sm:$0xff]
        %v289 = vld [vmem:[%s236 + $0x20] sm:$0xff]
        %v290 = vld [vmem:[%s236 + $0x28] sm:$0xff]
        %v291 = vld [vmem:[%s236 + $0x30] sm:$0xff]
        %v292 = vld [vmem:[%s236 + $0x38] sm:$0xff]
        %v293 = vld [vmem:[%s236 + $0x40] sm:$0xff]
        %v294 = vld [vmem:[%s236 + $0x48] sm:$0xff]
        %v295 = vld [vmem:[%s236 + $0x50] sm:$0xff]
        %v296 = vld [vmem:[%s236 + $0x58] sm:$0xff]
        %v297 = vld [vmem:[%s236 + $0x60] sm:$0xff]
        %v298 = vld [vmem:[%s236 + $0x68] sm:$0xff]
        %v299 = vld [vmem:[%s236 + $0x70] sm:$0xff]
        %v300 = vld [vmem:[%s236 + $0x78] sm:$0xff]
        %v301 = vld [vmem:[%s236 + $0x80] sm:$0xff]
        %v302 = vld [vmem:[%s236 + $0x88] sm:$0xff]
        %v303 = vld [vmem:[%s236 + $0x90] sm:$0xff]
        %v304 = vld [vmem:[%s236 + $0x98] sm:$0xff]
        %v305 = vld [vmem:[%s236 + $0xa0] sm:$0xff]
        %v306 = vld [vmem:[%s236 + $0xa8] sm:$0xff]
        %v307 = vld [vmem:[%s236 + $0xb0] sm:$0xff]
        %v308 = vld [vmem:[%s236 + $0xb8] sm:$0xff]
        %v309 = vld [vmem:[%s236 + $0xc0] sm:$0xff]
        %v310 = vld [vmem:[%s236 + $0xc8] sm:$0xff]
        %v311 = vld [vmem:[%s236 + $0xd0] sm:$0xff]
        %v312 = vld [vmem:[%s236 + $0xd8] sm:$0xff]
        %v313 = vld [vmem:[%s236 + $0xe0] sm:$0xff]
        %v314 = vld [vmem:[%s236 + $0xe8] sm:$0xff]
        %v315 = vld [vmem:[%s236 + $0xf0] sm:$0xff]
        %v316 = vld [vmem:[%s236 + $0xf8] sm:$0xff]
        %v317 = vld [vmem:[%s236 + $0x100] sm:$0xff]
        %v318 = vld [vmem:[%s236 + $0x108] sm:$0xff]
        %v319 = vld [vmem:[%s236 + $0x110] sm:$0xff]
        %v320 = vld [vmem:[%s236 + $0x118] sm:$0xff]
        %v321 = vld [vmem:[%s236 + $0x120] sm:$0xff]
        %v322 = vld [vmem:[%s236 + $0x128] sm:$0xff]
        %v323 = vld [vmem:[%s236 + $0x130] sm:$0xff]
        %v324 = vld [vmem:[%s236 + $0x138] sm:$0xff]
        %v325 = vld [vmem:[%s236 + $0x140] sm:$0xff]
        %v326 = vld [vmem:[%s236 + $0x148] sm:$0xff]
        %v327 = vld [vmem:[%s236 + $0x150] sm:$0xff]
        %v328 = vld [vmem:[%s236 + $0x158] sm:$0xff]
        %v329 = vld [vmem:[%s236 + $0x160] sm:$0xff]
        %v330 = vld [vmem:[%s236 + $0x168] sm:$0xff]
        %v331 = vld [vmem:[%s236 + $0x170] sm:$0xff]
        %v332 = vld [vmem:[%s236 + $0x178] sm:$0xff]
        %v333 = vld [vmem:[%s236 + $0x180] sm:$0xff]
        %v334 = vld [vmem:[%s236 + $0x188] sm:$0xff]
        %v335 = vld [vmem:[%s236 + $0x190] sm:$0xff]
        %v336 = vld [vmem:[%s236 + $0x198] sm:$0xff]
        %v337 = vld [vmem:[%s236 + $0x1a0] sm:$0xff]
        %v338 = vld [vmem:[%s236 + $0x1a8] sm:$0xff]
        %v339 = vld [vmem:[%s236 + $0x1b0] sm:$0xff]
        %v340 = vld [vmem:[%s236 + $0x1b8] sm:$0xff]
        %v341 = vld [vmem:[%s236 + $0x1c0] sm:$0xff]
        %v342 = vld [vmem:[%s236 + $0x1c8] sm:$0xff]
        %v343 = vld [vmem:[%s236 + $0x1d0] sm:$0xff]
        %v344 = vld [vmem:[%s236 + $0x1d8] sm:$0xff]
        %v345 = vld [vmem:[%s236 + $0x1e0] sm:$0xff]
        %v346 = vld [vmem:[%s236 + $0x1e8] sm:$0xff]
        %v347 = vld [vmem:[%s236 + $0x1f0] sm:$0xff]
        %v348 = vld [vmem:[%s236 + $0x1f8] sm:$0xff]
        %v349 = vld [vmem:[%s236 + $0x200] sm:$0xff]
        %v350 = vld [vmem:[%s236 + $0x208] sm:$0xff]
        %v351 = vld [vmem:[%s236 + $0x210] sm:$0xff]
        %v352 = vld [vmem:[%s236 + $0x218] sm:$0xff]
        %v353 = vld [vmem:[%s236 + $0x220] sm:$0xff]
        %v354 = vld [vmem:[%s236 + $0x228] sm:$0xff]
        %v355 = vld [vmem:[%s236 + $0x230] sm:$0xff]
        %v356 = vld [vmem:[%s236 + $0x238] sm:$0xff]
        %v357 = vld [vmem:[%s236 + $0x240] sm:$0xff]
        %v358 = vld [vmem:[%s236 + $0x248] sm:$0xff]
        %v359 = vld [vmem:[%s236 + $0x250] sm:$0xff]
        %v360 = vld [vmem:[%s236 + $0x258] sm:$0xff]
        %v361 = vld [vmem:[%s236 + $0x260] sm:$0xff]
        %v362 = vld [vmem:[%s236 + $0x268] sm:$0xff]
        %v363 = vld [vmem:[%s236 + $0x270] sm:$0xff]
        %v364 = vld [vmem:[%s236 + $0x278] sm:$0xff]
        %v365 = vld [vmem:[%s236 + $0x280] sm:$0xff]
        %v366 = vld [vmem:[%s236 + $0x288] sm:$0xff]
        %v367 = vld [vmem:[%s236 + $0x290] sm:$0xff]
        %v368 = vld [vmem:[%s236 + $0x298] sm:$0xff]
        %v369 = vld [vmem:[%s236 + $0x2a0] sm:$0xff]
        %v370 = vld [vmem:[%s236 + $0x2a8] sm:$0xff]
        %v371 = vld [vmem:[%s236 + $0x2b0] sm:$0xff]
        %v372 = vld [vmem:[%s236 + $0x2b8] sm:$0xff]
        %v373 = vld [vmem:[%s236 + $0x2c0] sm:$0xff]
        %v374 = vld [vmem:[%s236 + $0x2c8] sm:$0xff]
        %v375 = vld [vmem:[%s236 + $0x2d0] sm:$0xff]
        %v376 = vld [vmem:[%s236 + $0x2d8] sm:$0xff]
        %v377 = vld [vmem:[%s236 + $0x2e0] sm:$0xff]
        %v378 = vld [vmem:[%s236 + $0x2e8] sm:$0xff]
        %v379 = vld [vmem:[%s236 + $0x2f0] sm:$0xff]
        %v380 = vld [vmem:[%s236 + $0x2f8] sm:$0xff]
        %v381 = vld [vmem:[%s236 + $0x300] sm:$0xff]
        %v382 = vld [vmem:[%s236 + $0x308] sm:$0xff]
        %v383 = vld [vmem:[%s236 + $0x310] sm:$0xff]
        %v384 = vld [vmem:[%s236 + $0x318] sm:$0xff]
        %v385 = vld [vmem:[%s236 + $0x320] sm:$0xff]
        %v386 = vld [vmem:[%s236 + $0x328] sm:$0xff]
        %v387 = vld [vmem:[%s236 + $0x330] sm:$0xff]
        %v388 = vld [vmem:[%s236 + $0x338] sm:$0xff]
        %v389 = vld [vmem:[%s236 + $0x340] sm:$0xff]
        %v390 = vld [vmem:[%s236 + $0x348] sm:$0xff]
        %v391 = vld [vmem:[%s236 + $0x350] sm:$0xff]
        %v392 = vld [vmem:[%s236 + $0x358] sm:$0xff]
        %v393 = vld [vmem:[%s236 + $0x360] sm:$0xff]
        %v394 = vld [vmem:[%s236 + $0x368] sm:$0xff]
        %v395 = vld [vmem:[%s236 + $0x370] sm:$0xff]
        %v396 = vld [vmem:[%s236 + $0x378] sm:$0xff]
        %v397 = vld [vmem:[%s236 + $0x380] sm:$0xff]
        %v398 = vld [vmem:[%s236 + $0x388] sm:$0xff]
        %v399 = vld [vmem:[%s236 + $0x390] sm:$0xff]
        %v400 = vld [vmem:[%s236 + $0x398] sm:$0xff]
        %v401 = vld [vmem:[%s236 + $0x3a0] sm:$0xff]
        %v402 = vld [vmem:[%s236 + $0x3a8] sm:$0xff]
        %v403 = vld [vmem:[%s236 + $0x3b0] sm:$0xff]
        %v404 = vld [vmem:[%s236 + $0x3b8] sm:$0xff]
        %v405 = vld [vmem:[%s236 + $0x3c0] sm:$0xff]
        %v406 = vld [vmem:[%s236 + $0x3c8] sm:$0xff]
        %v407 = vld [vmem:[%s236 + $0x3d0] sm:$0xff]
        %v408 = vld [vmem:[%s236 + $0x3d8] sm:$0xff]
        %v409 = vld [vmem:[%s236 + $0x3e0] sm:$0xff]
        %v410 = vld [vmem:[%s236 + $0x3e8] sm:$0xff]
        %v411 = vld [vmem:[%s236 + $0x3f0] sm:$0xff]
        %v412 = vld [vmem:[%s236 + $0x3f8] sm:$0xff]
        %v413 = vld [vmem:[%s245] sm:$0xff]
        %v414 = vld [vmem:[%s245 + $0x8] sm:$0xff]
        %v415 = vld [vmem:[%s245 + $0x10] sm:$0xff]
        %v416 = vld [vmem:[%s245 + $0x18] sm:$0xff]
        %v417 = vld [vmem:[%s245 + $0x20] sm:$0xff]
        %v418 = vld [vmem:[%s245 + $0x28] sm:$0xff]
        %v419 = vld [vmem:[%s245 + $0x30] sm:$0xff]
        %v420 = vld [vmem:[%s245 + $0x38] sm:$0xff]
        %v421 = vld [vmem:[%s245 + $0x40] sm:$0xff]
        %v422 = vld [vmem:[%s245 + $0x48] sm:$0xff]
        %v423 = vld [vmem:[%s245 + $0x50] sm:$0xff]
        %v424 = vld [vmem:[%s245 + $0x58] sm:$0xff]
        %v425 = vld [vmem:[%s245 + $0x60] sm:$0xff]
        %v426 = vld [vmem:[%s245 + $0x68] sm:$0xff]
        %v427 = vld [vmem:[%s245 + $0x70] sm:$0xff]
        %v428 = vld [vmem:[%s245 + $0x78] sm:$0xff]
        %v429 = vld [vmem:[%s245 + $0x80] sm:$0xff]
        %v430 = vld [vmem:[%s245 + $0x88] sm:$0xff]
        %v431 = vld [vmem:[%s245 + $0x90] sm:$0xff]
        %v432 = vld [vmem:[%s245 + $0x98] sm:$0xff]
        %v433 = vld [vmem:[%s245 + $0xa0] sm:$0xff]
        %v434 = vld [vmem:[%s245 + $0xa8] sm:$0xff]
        %v435 = vld [vmem:[%s245 + $0xb0] sm:$0xff]
        %v436 = vld [vmem:[%s245 + $0xb8] sm:$0xff]
        %v437 = vld [vmem:[%s245 + $0xc0] sm:$0xff]
        %v438 = vld [vmem:[%s245 + $0xc8] sm:$0xff]
        %v439 = vld [vmem:[%s245 + $0xd0] sm:$0xff]
        %v440 = vld [vmem:[%s245 + $0xd8] sm:$0xff]
        %v441 = vld [vmem:[%s245 + $0xe0] sm:$0xff]
        %v442 = vld [vmem:[%s245 + $0xe8] sm:$0xff]
        %v443 = vld [vmem:[%s245 + $0xf0] sm:$0xff]
        %v444 = vld [vmem:[%s245 + $0xf8] sm:$0xff]
        %v445 = vld [vmem:[%s245 + $0x100] sm:$0xff]
        %v446 = vld [vmem:[%s245 + $0x108] sm:$0xff]
        %v447 = vld [vmem:[%s245 + $0x110] sm:$0xff]
        %v448 = vld [vmem:[%s245 + $0x118] sm:$0xff]
        %v449 = vld [vmem:[%s245 + $0x120] sm:$0xff]
        %v450 = vld [vmem:[%s245 + $0x128] sm:$0xff]
        %v451 = vld [vmem:[%s245 + $0x130] sm:$0xff]
        %v452 = vld [vmem:[%s245 + $0x138] sm:$0xff]
        %v453 = vld [vmem:[%s245 + $0x140] sm:$0xff]
        %v454 = vld [vmem:[%s245 + $0x148] sm:$0xff]
        %v455 = vld [vmem:[%s245 + $0x150] sm:$0xff]
        %v456 = vld [vmem:[%s245 + $0x158] sm:$0xff]
        %v457 = vld [vmem:[%s245 + $0x160] sm:$0xff]
        %v458 = vld [vmem:[%s245 + $0x168] sm:$0xff]
        %v459 = vld [vmem:[%s245 + $0x170] sm:$0xff]
        %v460 = vld [vmem:[%s245 + $0x178] sm:$0xff]
        %v461 = vld [vmem:[%s245 + $0x180] sm:$0xff]
        %v462 = vld [vmem:[%s245 + $0x188] sm:$0xff]
        %v463 = vld [vmem:[%s245 + $0x190] sm:$0xff]
        %v464 = vld [vmem:[%s245 + $0x198] sm:$0xff]
        %v465 = vld [vmem:[%s245 + $0x1a0] sm:$0xff]
        %v466 = vld [vmem:[%s245 + $0x1a8] sm:$0xff]
        %v467 = vld [vmem:[%s245 + $0x1b0] sm:$0xff]
        %v468 = vld [vmem:[%s245 + $0x1b8] sm:$0xff]
        %v469 = vld [vmem:[%s245 + $0x1c0] sm:$0xff]
        %v470 = vld [vmem:[%s245 + $0x1c8] sm:$0xff]
        %v471 = vld [vmem:[%s245 + $0x1d0] sm:$0xff]
        %v472 = vld [vmem:[%s245 + $0x1d8] sm:$0xff]
        %v473 = vld [vmem:[%s245 + $0x1e0] sm:$0xff]
        %v474 = vld [vmem:[%s245 + $0x1e8] sm:$0xff]
        %v475 = vld [vmem:[%s245 + $0x1f0] sm:$0xff]
        %v476 = vld [vmem:[%s245 + $0x1f8] sm:$0xff]
        %v477 = vld [vmem:[%s245 + $0x200] sm:$0xff]
        %v478 = vld [vmem:[%s245 + $0x208] sm:$0xff]
        %v479 = vld [vmem:[%s245 + $0x210] sm:$0xff]
        %v480 = vld [vmem:[%s245 + $0x218] sm:$0xff]
        %v481 = vld [vmem:[%s245 + $0x220] sm:$0xff]
        %v482 = vld [vmem:[%s245 + $0x228] sm:$0xff]
        %v483 = vld [vmem:[%s245 + $0x230] sm:$0xff]
        %v484 = vld [vmem:[%s245 + $0x238] sm:$0xff]
        %v485 = vld [vmem:[%s245 + $0x240] sm:$0xff]
        %v486 = vld [vmem:[%s245 + $0x248] sm:$0xff]
        %v487 = vld [vmem:[%s245 + $0x250] sm:$0xff]
        %v488 = vld [vmem:[%s245 + $0x258] sm:$0xff]
        %v489 = vld [vmem:[%s245 + $0x260] sm:$0xff]
        %v490 = vld [vmem:[%s245 + $0x268] sm:$0xff]
        %v491 = vld [vmem:[%s245 + $0x270] sm:$0xff]
        %v492 = vld [vmem:[%s245 + $0x278] sm:$0xff]
        %v493 = vld [vmem:[%s245 + $0x280] sm:$0xff]
        %v494 = vld [vmem:[%s245 + $0x288] sm:$0xff]
        %v495 = vld [vmem:[%s245 + $0x290] sm:$0xff]
        %v496 = vld [vmem:[%s245 + $0x298] sm:$0xff]
        %v497 = vld [vmem:[%s245 + $0x2a0] sm:$0xff]
        %v498 = vld [vmem:[%s245 + $0x2a8] sm:$0xff]
        %v499 = vld [vmem:[%s245 + $0x2b0] sm:$0xff]
        %v500 = vld [vmem:[%s245 + $0x2b8] sm:$0xff]
        %v501 = vld [vmem:[%s245 + $0x2c0] sm:$0xff]
        %v502 = vld [vmem:[%s245 + $0x2c8] sm:$0xff]
        %v503 = vld [vmem:[%s245 + $0x2d0] sm:$0xff]
        %v504 = vld [vmem:[%s245 + $0x2d8] sm:$0xff]
        %v505 = vld [vmem:[%s245 + $0x2e0] sm:$0xff]
        %v506 = vld [vmem:[%s245 + $0x2e8] sm:$0xff]
        %v507 = vld [vmem:[%s245 + $0x2f0] sm:$0xff]
        %v508 = vld [vmem:[%s245 + $0x2f8] sm:$0xff]
        %v509 = vld [vmem:[%s245 + $0x300] sm:$0xff]
        %v510 = vld [vmem:[%s245 + $0x308] sm:$0xff]
        %v511 = vld [vmem:[%s245 + $0x310] sm:$0xff]
        %v512 = vld [vmem:[%s245 + $0x318] sm:$0xff]
        %v513 = vld [vmem:[%s245 + $0x320] sm:$0xff]
        %v514 = vld [vmem:[%s245 + $0x328] sm:$0xff]
        %v515 = vld [vmem:[%s245 + $0x330] sm:$0xff]
        %v516 = vld [vmem:[%s245 + $0x338] sm:$0xff]
        %v517 = vld [vmem:[%s245 + $0x340] sm:$0xff]
        %v518 = vld [vmem:[%s245 + $0x348] sm:$0xff]
        %v519 = vld [vmem:[%s245 + $0x350] sm:$0xff]
        %v520 = vld [vmem:[%s245 + $0x358] sm:$0xff]
        %v521 = vld [vmem:[%s245 + $0x360] sm:$0xff]
        %v522 = vld [vmem:[%s245 + $0x368] sm:$0xff]
        %v523 = vld [vmem:[%s245 + $0x370] sm:$0xff]
        %v524 = vld [vmem:[%s245 + $0x378] sm:$0xff]
        %v525 = vld [vmem:[%s245 + $0x380] sm:$0xff]
        %v526 = vld [vmem:[%s245 + $0x388] sm:$0xff]
        %v527 = vld [vmem:[%s245 + $0x390] sm:$0xff]
        %v528 = vld [vmem:[%s245 + $0x398] sm:$0xff]
        %v529 = vld [vmem:[%s245 + $0x3a0] sm:$0xff]
        %v530 = vld [vmem:[%s245 + $0x3a8] sm:$0xff]
        %v531 = vld [vmem:[%s245 + $0x3b0] sm:$0xff]
        %v532 = vld [vmem:[%s245 + $0x3b8] sm:$0xff]
        %v533 = vld [vmem:[%s245 + $0x3c0] sm:$0xff]
        %v534 = vld [vmem:[%s245 + $0x3c8] sm:$0xff]
        %v535 = vld [vmem:[%s245 + $0x3d0] sm:$0xff]
        %v536 = vld [vmem:[%s245 + $0x3d8] sm:$0xff]
        %v537 = vld [vmem:[%s245 + $0x3e0] sm:$0xff]
        %v538 = vld [vmem:[%s245 + $0x3e8] sm:$0xff]
        %v539 = vld [vmem:[%s245 + $0x3f0] sm:$0xff]
        %v540 = vld [vmem:[%s245 + $0x3f8] sm:$0xff]
        %s541 = sld [smem:[#allocation2]]
        %s542 = sld [smem:[#allocation2 + $0x1]]
        %s543 = sld [smem:[#allocation2 + $0x80]]
        %s544 = sld [smem:[#allocation2 + $0x81]]
        %v545 = vstv %s541
        %v546 = vmul.f32 %v545, %v285
        %v547 = vmul.f32 %v545, %v286
        %v548 = vmul.f32 %v545, %v287
        %v549 = vmul.f32 %v545, %v288
        %v550 = vmul.f32 %v545, %v289
        %v551 = vmul.f32 %v545, %v290
        %v552 = vmul.f32 %v545, %v291
        %v553 = vmul.f32 %v545, %v292
        %v554 = vmul.f32 %v545, %v293
        %v555 = vmul.f32 %v545, %v294
        %v556 = vmul.f32 %v545, %v295
        %v557 = vmul.f32 %v545, %v296
        %v558 = vmul.f32 %v545, %v297
        %v559 = vmul.f32 %v545, %v298
        %v560 = vmul.f32 %v545, %v299
        %v561 = vmul.f32 %v545, %v300
        %v562 = vmul.f32 %v545, %v301
        %v563 = vmul.f32 %v545, %v302
        %v564 = vmul.f32 %v545, %v303
        %v565 = vmul.f32 %v545, %v304
        %v566 = vmul.f32 %v545, %v305
        %v567 = vmul.f32 %v545, %v306
        %v568 = vmul.f32 %v545, %v307
        %v569 = vmul.f32 %v545, %v308
        %v570 = vmul.f32 %v545, %v309
        %v571 = vmul.f32 %v545, %v310
        %v572 = vmul.f32 %v545, %v311
        %v573 = vmul.f32 %v545, %v312
        %v574 = vmul.f32 %v545, %v313
        %v575 = vmul.f32 %v545, %v314
        %v576 = vmul.f32 %v545, %v315
        %v577 = vmul.f32 %v545, %v316
        %v578 = vmul.f32 %v545, %v317
        %v579 = vmul.f32 %v545, %v318
        %v580 = vmul.f32 %v545, %v319
        %v581 = vmul.f32 %v545, %v320
        %v582 = vmul.f32 %v545, %v321
        %v583 = vmul.f32 %v545, %v322
        %v584 = vmul.f32 %v545, %v323
        %v585 = vmul.f32 %v545, %v324
        %v586 = vmul.f32 %v545, %v325
        %v587 = vmul.f32 %v545, %v326
        %v588 = vmul.f32 %v545, %v327
        %v589 = vmul.f32 %v545, %v328
        %v590 = vmul.f32 %v545, %v329
        %v591 = vmul.f32 %v545, %v330
        %v592 = vmul.f32 %v545, %v331
        %v593 = vmul.f32 %v545, %v332
        %v594 = vmul.f32 %v545, %v333
        %v595 = vmul.f32 %v545, %v334
        %v596 = vmul.f32 %v545, %v335
        %v597 = vmul.f32 %v545, %v336
        %v598 = vmul.f32 %v545, %v337
        %v599 = vmul.f32 %v545, %v338
        %v600 = vmul.f32 %v545, %v339
        %v601 = vmul.f32 %v545, %v340
        %v602 = vmul.f32 %v545, %v341
        %v603 = vmul.f32 %v545, %v342
        %v604 = vmul.f32 %v545, %v343
        %v605 = vmul.f32 %v545, %v344
        %v606 = vmul.f32 %v545, %v345
        %v607 = vmul.f32 %v545, %v346
        %v608 = vmul.f32 %v545, %v347
        %v609 = vmul.f32 %v545, %v348
        %v610 = vmul.f32 %v545, %v349
        %v611 = vmul.f32 %v545, %v350
        %v612 = vmul.f32 %v545, %v351
        %v613 = vmul.f32 %v545, %v352
        %v614 = vmul.f32 %v545, %v353
        %v615 = vmul.f32 %v545, %v354
        %v616 = vmul.f32 %v545, %v355
        %v617 = vmul.f32 %v545, %v356
        %v618 = vmul.f32 %v545, %v357
        %v619 = vmul.f32 %v545, %v358
        %v620 = vmul.f32 %v545, %v359
        %v621 = vmul.f32 %v545, %v360
        %v622 = vmul.f32 %v545, %v361
        %v623 = vmul.f32 %v545, %v362
        %v624 = vmul.f32 %v545, %v363
        %v625 = vmul.f32 %v545, %v364
        %v626 = vmul.f32 %v545, %v365
        %v627 = vmul.f32 %v545, %v366
        %v628 = vmul.f32 %v545, %v367
        %v629 = vmul.f32 %v545, %v368
        %v630 = vmul.f32 %v545, %v369
        %v631 = vmul.f32 %v545, %v370
        %v632 = vmul.f32 %v545, %v371
        %v633 = vmul.f32 %v545, %v372
        %v634 = vmul.f32 %v545, %v373
        %v635 = vmul.f32 %v545, %v374
        %v636 = vmul.f32 %v545, %v375
        %v637 = vmul.f32 %v545, %v376
        %v638 = vmul.f32 %v545, %v377
        %v639 = vmul.f32 %v545, %v378
        %v640 = vmul.f32 %v545, %v379
        %v641 = vmul.f32 %v545, %v380
        %v642 = vmul.f32 %v545, %v381
        %v643 = vmul.f32 %v545, %v382
        %v644 = vmul.f32 %v545, %v383
        %v645 = vmul.f32 %v545, %v384
        %v646 = vmul.f32 %v545, %v385
        %v647 = vmul.f32 %v545, %v386
        %v648 = vmul.f32 %v545, %v387
        %v649 = vmul.f32 %v545, %v388
        %v650 = vmul.f32 %v545, %v389
        %v651 = vmul.f32 %v545, %v390
        %v652 = vmul.f32 %v545, %v391
        %v653 = vmul.f32 %v545, %v392
        %v654 = vmul.f32 %v545, %v393
        %v655 = vmul.f32 %v545, %v394
        %v656 = vmul.f32 %v545, %v395
        %v657 = vmul.f32 %v545, %v396
        %v658 = vmul.f32 %v545, %v397
        %v659 = vmul.f32 %v545, %v398
        %v660 = vmul.f32 %v545, %v399
        %v661 = vmul.f32 %v545, %v400
        %v662 = vmul.f32 %v545, %v401
        %v663 = vmul.f32 %v545, %v402
        %v664 = vmul.f32 %v545, %v403
        %v665 = vmul.f32 %v545, %v404
        %v666 = vmul.f32 %v545, %v405
        %v667 = vmul.f32 %v545, %v406
        %v668 = vmul.f32 %v545, %v407
        %v669 = vmul.f32 %v545, %v408
        %v670 = vmul.f32 %v545, %v409
        %v671 = vmul.f32 %v545, %v410
        %v672 = vmul.f32 %v545, %v411
        %v673 = vmul.f32 %v545, %v412
        %v674 = vstv %s543
        %v675 = vmul.f32 %v674, %v413
        %v676 = vmul.f32 %v674, %v414
        %v677 = vmul.f32 %v674, %v415
        %v678 = vmul.f32 %v674, %v416
        %v679 = vmul.f32 %v674, %v417
        %v680 = vmul.f32 %v674, %v418
        %v681 = vmul.f32 %v674, %v419
        %v682 = vmul.f32 %v674, %v420
        %v683 = vmul.f32 %v674, %v421
        %v684 = vmul.f32 %v674, %v422
        %v685 = vmul.f32 %v674, %v423
        %v686 = vmul.f32 %v674, %v424
        %v687 = vmul.f32 %v674, %v425
        %v688 = vmul.f32 %v674, %v426
        %v689 = vmul.f32 %v674, %v427
        %v690 = vmul.f32 %v674, %v428
        %v691 = vmul.f32 %v674, %v429
        %v692 = vmul.f32 %v674, %v430
        %v693 = vmul.f32 %v674, %v431
        %v694 = vmul.f32 %v674, %v432
        %v695 = vmul.f32 %v674, %v433
        %v696 = vmul.f32 %v674, %v434
        %v697 = vmul.f32 %v674, %v435
        %v698 = vmul.f32 %v674, %v436
        %v699 = vmul.f32 %v674, %v437
        %v700 = vmul.f32 %v674, %v438
        %v701 = vmul.f32 %v674, %v439
        %v702 = vmul.f32 %v674, %v440
        %v703 = vmul.f32 %v674, %v441
        %v704 = vmul.f32 %v674, %v442
        %v705 = vmul.f32 %v674, %v443
        %v706 = vmul.f32 %v674, %v444
        %v707 = vmul.f32 %v674, %v445
        %v708 = vmul.f32 %v674, %v446
        %v709 = vmul.f32 %v674, %v447
        %v710 = vmul.f32 %v674, %v448
        %v711 = vmul.f32 %v674, %v449
        %v712 = vmul.f32 %v674, %v450
        %v713 = vmul.f32 %v674, %v451
        %v714 = vmul.f32 %v674, %v452
        %v715 = vmul.f32 %v674, %v453
        %v716 = vmul.f32 %v674, %v454
        %v717 = vmul.f32 %v674, %v455
        %v718 = vmul.f32 %v674, %v456
        %v719 = vmul.f32 %v674, %v457
        %v720 = vmul.f32 %v674, %v458
        %v721 = vmul.f32 %v674, %v459
        %v722 = vmul.f32 %v674, %v460
        %v723 = vmul.f32 %v674, %v461
        %v724 = vmul.f32 %v674, %v462
        %v725 = vmul.f32 %v674, %v463
        %v726 = vmul.f32 %v674, %v464
        %v727 = vmul.f32 %v674, %v465
        %v728 = vmul.f32 %v674, %v466
        %v729 = vmul.f32 %v674, %v467
        %v730 = vmul.f32 %v674, %v468
        %v731 = vmul.f32 %v674, %v469
        %v732 = vmul.f32 %v674, %v470
        %v733 = vmul.f32 %v674, %v471
        %v734 = vmul.f32 %v674, %v472
        %v735 = vmul.f32 %v674, %v473
        %v736 = vmul.f32 %v674, %v474
        %v737 = vmul.f32 %v674, %v475
        %v738 = vmul.f32 %v674, %v476
        %v739 = vmul.f32 %v674, %v477
        %v740 = vmul.f32 %v674, %v478
        %v741 = vmul.f32 %v674, %v479
        %v742 = vmul.f32 %v674, %v480
        %v743 = vmul.f32 %v674, %v481
        %v744 = vmul.f32 %v674, %v482
        %v745 = vmul.f32 %v674, %v483
        %v746 = vmul.f32 %v674, %v484
        %v747 = vmul.f32 %v674, %v485
        %v748 = vmul.f32 %v674, %v486
        %v749 = vmul.f32 %v674, %v487
        %v750 = vmul.f32 %v674, %v488
        %v751 = vmul.f32 %v674, %v489
        %v752 = vmul.f32 %v674, %v490
        %v753 = vmul.f32 %v674, %v491
        %v754 = vmul.f32 %v674, %v492
        %v755 = vmul.f32 %v674, %v493
        %v756 = vmul.f32 %v674, %v494
        %v757 = vmul.f32 %v674, %v495
        %v758 = vmul.f32 %v674, %v496
        %v759 = vmul.f32 %v674, %v497
        %v760 = vmul.f32 %v674, %v498
        %v761 = vmul.f32 %v674, %v499
        %v762 = vmul.f32 %v674, %v500
        %v763 = vmul.f32 %v674, %v501
        %v764 = vmul.f32 %v674, %v502
        %v765 = vmul.f32 %v674, %v503
        %v766 = vmul.f32 %v674, %v504
        %v767 = vmul.f32 %v674, %v505
        %v768 = vmul.f32 %v674, %v506
        %v769 = vmul.f32 %v674, %v507
        %v770 = vmul.f32 %v674, %v508
        %v771 = vmul.f32 %v674, %v509
        %v772 = vmul.f32 %v674, %v510
        %v773 = vmul.f32 %v674, %v511
        %v774 = vmul.f32 %v674, %v512
        %v775 = vmul.f32 %v674, %v513
        %v776 = vmul.f32 %v674, %v514
        %v777 = vmul.f32 %v674, %v515
        %v778 = vmul.f32 %v674, %v516
        %v779 = vmul.f32 %v674, %v517
        %v780 = vmul.f32 %v674, %v518
        %v781 = vmul.f32 %v674, %v519
        %v782 = vmul.f32 %v674, %v520
        %v783 = vmul.f32 %v674, %v521
        %v784 = vmul.f32 %v674, %v522
        %v785 = vmul.f32 %v674, %v523
        %v786 = vmul.f32 %v674, %v524
        %v787 = vmul.f32 %v674, %v525
        %v788 = vmul.f32 %v674, %v526
        %v789 = vmul.f32 %v674, %v527
        %v790 = vmul.f32 %v674, %v528
        %v791 = vmul.f32 %v674, %v529
        %v792 = vmul.f32 %v674, %v530
        %v793 = vmul.f32 %v674, %v531
        %v794 = vmul.f32 %v674, %v532
        %v795 = vmul.f32 %v674, %v533
        %v796 = vmul.f32 %v674, %v534
        %v797 = vmul.f32 %v674, %v535
        %v798 = vmul.f32 %v674, %v536
        %v799 = vmul.f32 %v674, %v537
        %v800 = vmul.f32 %v674, %v538
        %v801 = vmul.f32 %v674, %v539
        %v802 = vmul.f32 %v674, %v540
        %v803 = vadd.f32 %v546, %v675
        %v804 = vadd.f32 %v547, %v676
        %v805 = vadd.f32 %v548, %v677
        %v806 = vadd.f32 %v549, %v678
        %v807 = vadd.f32 %v550, %v679
        %v808 = vadd.f32 %v551, %v680
        %v809 = vadd.f32 %v552, %v681
        %v810 = vadd.f32 %v553, %v682
        %v811 = vadd.f32 %v554, %v683
        %v812 = vadd.f32 %v555, %v684
        %v813 = vadd.f32 %v556, %v685
        %v814 = vadd.f32 %v557, %v686
        %v815 = vadd.f32 %v558, %v687
        %v816 = vadd.f32 %v559, %v688
        %v817 = vadd.f32 %v560, %v689
        %v818 = vadd.f32 %v561, %v690
        %v819 = vadd.f32 %v562, %v691
        %v820 = vadd.f32 %v563, %v692
        %v821 = vadd.f32 %v564, %v693
        %v822 = vadd.f32 %v565, %v694
        %v823 = vadd.f32 %v566, %v695
        %v824 = vadd.f32 %v567, %v696
        %v825 = vadd.f32 %v568, %v697
        %v826 = vadd.f32 %v569, %v698
        %v827 = vadd.f32 %v570, %v699
        %v828 = vadd.f32 %v571, %v700
        %v829 = vadd.f32 %v572, %v701
        %v830 = vadd.f32 %v573, %v702
        %v831 = vadd.f32 %v574, %v703
        %v832 = vadd.f32 %v575, %v704
        %v833 = vadd.f32 %v576, %v705
        %v834 = vadd.f32 %v577, %v706
        %v835 = vadd.f32 %v578, %v707
        %v836 = vadd.f32 %v579, %v708
        %v837 = vadd.f32 %v580, %v709
        %v838 = vadd.f32 %v581, %v710
        %v839 = vadd.f32 %v582, %v711
        %v840 = vadd.f32 %v583, %v712
        %v841 = vadd.f32 %v584, %v713
        %v842 = vadd.f32 %v585, %v714
        %v843 = vadd.f32 %v586, %v715
        %v844 = vadd.f32 %v587, %v716
        %v845 = vadd.f32 %v588, %v717
        %v846 = vadd.f32 %v589, %v718
        %v847 = vadd.f32 %v590, %v719
        %v848 = vadd.f32 %v591, %v720
        %v849 = vadd.f32 %v592, %v721
        %v850 = vadd.f32 %v593, %v722
        %v851 = vadd.f32 %v594, %v723
        %v852 = vadd.f32 %v595, %v724
        %v853 = vadd.f32 %v596, %v725
        %v854 = vadd.f32 %v597, %v726
        %v855 = vadd.f32 %v598, %v727
        %v856 = vadd.f32 %v599, %v728
        %v857 = vadd.f32 %v600, %v729
        %v858 = vadd.f32 %v601, %v730
        %v859 = vadd.f32 %v602, %v731
        %v860 = vadd.f32 %v603, %v732
        %v861 = vadd.f32 %v604, %v733
        %v862 = vadd.f32 %v605, %v734
        %v863 = vadd.f32 %v606, %v735
        %v864 = vadd.f32 %v607, %v736
        %v865 = vadd.f32 %v608, %v737
        %v866 = vadd.f32 %v609, %v738
        %v867 = vadd.f32 %v610, %v739
        %v868 = vadd.f32 %v611, %v740
        %v869 = vadd.f32 %v612, %v741
        %v870 = vadd.f32 %v613, %v742
        %v871 = vadd.f32 %v614, %v743
        %v872 = vadd.f32 %v615, %v744
        %v873 = vadd.f32 %v616, %v745
        %v874 = vadd.f32 %v617, %v746
        %v875 = vadd.f32 %v618, %v747
        %v876 = vadd.f32 %v619, %v748
        %v877 = vadd.f32 %v620, %v749
        %v878 = vadd.f32 %v621, %v750
        %v879 = vadd.f32 %v622, %v751
        %v880 = vadd.f32 %v623, %v752
        %v881 = vadd.f32 %v624, %v753
        %v882 = vadd.f32 %v625, %v754
        %v883 = vadd.f32 %v626, %v755
        %v884 = vadd.f32 %v627, %v756
        %v885 = vadd.f32 %v628, %v757
        %v886 = vadd.f32 %v629, %v758
        %v887 = vadd.f32 %v630, %v759
        %v888 = vadd.f32 %v631, %v760
        %v889 = vadd.f32 %v632, %v761
        %v890 = vadd.f32 %v633, %v762
        %v891 = vadd.f32 %v634, %v763
        %v892 = vadd.f32 %v635, %v764
        %v893 = vadd.f32 %v636, %v765
        %v894 = vadd.f32 %v637, %v766
        %v895 = vadd.f32 %v638, %v767
        %v896 = vadd.f32 %v639, %v768
        %v897 = vadd.f32 %v640, %v769
        %v898 = vadd.f32 %v641, %v770
        %v899 = vadd.f32 %v642, %v771
        %v900 = vadd.f32 %v643, %v772
        %v901 = vadd.f32 %v644, %v773
        %v902 = vadd.f32 %v645, %v774
        %v903 = vadd.f32 %v646, %v775
        %v904 = vadd.f32 %v647, %v776
        %v905 = vadd.f32 %v648, %v777
        %v906 = vadd.f32 %v649, %v778
        %v907 = vadd.f32 %v650, %v779
        %v908 = vadd.f32 %v651, %v780
        %v909 = vadd.f32 %v652, %v781
        %v910 = vadd.f32 %v653, %v782
        %v911 = vadd.f32 %v654, %v783
        %v912 = vadd.f32 %v655, %v784
        %v913 = vadd.f32 %v656, %v785
        %v914 = vadd.f32 %v657, %v786
        %v915 = vadd.f32 %v658, %v787
        %v916 = vadd.f32 %v659, %v788
        %v917 = vadd.f32 %v660, %v789
        %v918 = vadd.f32 %v661, %v790
        %v919 = vadd.f32 %v662, %v791
        %v920 = vadd.f32 %v663, %v792
        %v921 = vadd.f32 %v664, %v793
        %v922 = vadd.f32 %v665, %v794
        %v923 = vadd.f32 %v666, %v795
        %v924 = vadd.f32 %v667, %v796
        %v925 = vadd.f32 %v668, %v797
        %v926 = vadd.f32 %v669, %v798
        %v927 = vadd.f32 %v670, %v799
        %v928 = vadd.f32 %v671, %v800
        %v929 = vadd.f32 %v672, %v801
        %v930 = vadd.f32 %v673, %v802
        %931 = vst [vmem:[%s273] sm:$0xff] %v803
        %932 = vst [vmem:[%s273 + $0x8] sm:$0xff] %v804
        %933 = vst [vmem:[%s273 + $0x10] sm:$0xff] %v805
        %934 = vst [vmem:[%s273 + $0x18] sm:$0xff] %v806
        %935 = vst [vmem:[%s273 + $0x20] sm:$0xff] %v807
        %936 = vst [vmem:[%s273 + $0x28] sm:$0xff] %v808
        %937 = vst [vmem:[%s273 + $0x30] sm:$0xff] %v809
        %938 = vst [vmem:[%s273 + $0x38] sm:$0xff] %v810
        %939 = vst [vmem:[%s273 + $0x40] sm:$0xff] %v811
        %940 = vst [vmem:[%s273 + $0x48] sm:$0xff] %v812
        %941 = vst [vmem:[%s273 + $0x50] sm:$0xff] %v813
        %942 = vst [vmem:[%s273 + $0x58] sm:$0xff] %v814
        %943 = vst [vmem:[%s273 + $0x60] sm:$0xff] %v815
        %944 = vst [vmem:[%s273 + $0x68] sm:$0xff] %v816
        %945 = vst [vmem:[%s273 + $0x70] sm:$0xff] %v817
        %946 = vst [vmem:[%s273 + $0x78] sm:$0xff] %v818
        %947 = vst [vmem:[%s273 + $0x80] sm:$0xff] %v819
        %948 = vst [vmem:[%s273 + $0x88] sm:$0xff] %v820
        %949 = vst [vmem:[%s273 + $0x90] sm:$0xff] %v821
        %950 = vst [vmem:[%s273 + $0x98] sm:$0xff] %v822
        %951 = vst [vmem:[%s273 + $0xa0] sm:$0xff] %v823
        %952 = vst [vmem:[%s273 + $0xa8] sm:$0xff] %v824
        %953 = vst [vmem:[%s273 + $0xb0] sm:$0xff] %v825
        %954 = vst [vmem:[%s273 + $0xb8] sm:$0xff] %v826
        %955 = vst [vmem:[%s273 + $0xc0] sm:$0xff] %v827
        %956 = vst [vmem:[%s273 + $0xc8] sm:$0xff] %v828
        %957 = vst [vmem:[%s273 + $0xd0] sm:$0xff] %v829
        %958 = vst [vmem:[%s273 + $0xd8] sm:$0xff] %v830
        %959 = vst [vmem:[%s273 + $0xe0] sm:$0xff] %v831
        %960 = vst [vmem:[%s273 + $0xe8] sm:$0xff] %v832
        %961 = vst [vmem:[%s273 + $0xf0] sm:$0xff] %v833
        %962 = vst [vmem:[%s273 + $0xf8] sm:$0xff] %v834
        %963 = vst [vmem:[%s273 + $0x100] sm:$0xff] %v835
        %964 = vst [vmem:[%s273 + $0x108] sm:$0xff] %v836
        %965 = vst [vmem:[%s273 + $0x110] sm:$0xff] %v837
        %966 = vst [vmem:[%s273 + $0x118] sm:$0xff] %v838
        %967 = vst [vmem:[%s273 + $0x120] sm:$0xff] %v839
        %968 = vst [vmem:[%s273 + $0x128] sm:$0xff] %v840
        %969 = vst [vmem:[%s273 + $0x130] sm:$0xff] %v841
        %970 = vst [vmem:[%s273 + $0x138] sm:$0xff] %v842
        %971 = vst [vmem:[%s273 + $0x140] sm:$0xff] %v843
        %972 = vst [vmem:[%s273 + $0x148] sm:$0xff] %v844
        %973 = vst [vmem:[%s273 + $0x150] sm:$0xff] %v845
        %974 = vst [vmem:[%s273 + $0x158] sm:$0xff] %v846
        %975 = vst [vmem:[%s273 + $0x160] sm:$0xff] %v847
        %976 = vst [vmem:[%s273 + $0x168] sm:$0xff] %v848
        %977 = vst [vmem:[%s273 + $0x170] sm:$0xff] %v849
        %978 = vst [vmem:[%s273 + $0x178] sm:$0xff] %v850
        %979 = vst [vmem:[%s273 + $0x180] sm:$0xff] %v851
        %980 = vst [vmem:[%s273 + $0x188] sm:$0xff] %v852
        %981 = vst [vmem:[%s273 + $0x190] sm:$0xff] %v853
        %982 = vst [vmem:[%s273 + $0x198] sm:$0xff] %v854
        %983 = vst [vmem:[%s273 + $0x1a0] sm:$0xff] %v855
        %984 = vst [vmem:[%s273 + $0x1a8] sm:$0xff] %v856
        %985 = vst [vmem:[%s273 + $0x1b0] sm:$0xff] %v857
        %986 = vst [vmem:[%s273 + $0x1b8] sm:$0xff] %v858
        %987 = vst [vmem:[%s273 + $0x1c0] sm:$0xff] %v859
        %988 = vst [vmem:[%s273 + $0x1c8] sm:$0xff] %v860
        %989 = vst [vmem:[%s273 + $0x1d0] sm:$0xff] %v861
        %990 = vst [vmem:[%s273 + $0x1d8] sm:$0xff] %v862
        %991 = vst [vmem:[%s273 + $0x1e0] sm:$0xff] %v863
        %992 = vst [vmem:[%s273 + $0x1e8] sm:$0xff] %v864
        %993 = vst [vmem:[%s273 + $0x1f0] sm:$0xff] %v865
        %994 = vst [vmem:[%s273 + $0x1f8] sm:$0xff] %v866
        %995 = vst [vmem:[%s273 + $0x200] sm:$0xff] %v867
        %996 = vst [vmem:[%s273 + $0x208] sm:$0xff] %v868
        %997 = vst [vmem:[%s273 + $0x210] sm:$0xff] %v869
        %998 = vst [vmem:[%s273 + $0x218] sm:$0xff] %v870
        %999 = vst [vmem:[%s273 + $0x220] sm:$0xff] %v871
        %1000 = vst [vmem:[%s273 + $0x228] sm:$0xff] %v872
        %1001 = vst [vmem:[%s273 + $0x230] sm:$0xff] %v873
        %1002 = vst [vmem:[%s273 + $0x238] sm:$0xff] %v874
        %1003 = vst [vmem:[%s273 + $0x240] sm:$0xff] %v875
        %1004 = vst [vmem:[%s273 + $0x248] sm:$0xff] %v876
        %1005 = vst [vmem:[%s273 + $0x250] sm:$0xff] %v877
        %1006 = vst [vmem:[%s273 + $0x258] sm:$0xff] %v878
        %1007 = vst [vmem:[%s273 + $0x260] sm:$0xff] %v879
        %1008 = vst [vmem:[%s273 + $0x268] sm:$0xff] %v880
        %1009 = vst [vmem:[%s273 + $0x270] sm:$0xff] %v881
        %1010 = vst [vmem:[%s273 + $0x278] sm:$0xff] %v882
        %1011 = vst [vmem:[%s273 + $0x280] sm:$0xff] %v883
        %1012 = vst [vmem:[%s273 + $0x288] sm:$0xff] %v884
        %1013 = vst [vmem:[%s273 + $0x290] sm:$0xff] %v885
        %1014 = vst [vmem:[%s273 + $0x298] sm:$0xff] %v886
        %1015 = vst [vmem:[%s273 + $0x2a0] sm:$0xff] %v887
        %1016 = vst [vmem:[%s273 + $0x2a8] sm:$0xff] %v888
        %1017 = vst [vmem:[%s273 + $0x2b0] sm:$0xff] %v889
        %1018 = vst [vmem:[%s273 + $0x2b8] sm:$0xff] %v890
        %1019 = vst [vmem:[%s273 + $0x2c0] sm:$0xff] %v891
        %1020 = vst [vmem:[%s273 + $0x2c8] sm:$0xff] %v892
        %1021 = vst [vmem:[%s273 + $0x2d0] sm:$0xff] %v893
        %1022 = vst [vmem:[%s273 + $0x2d8] sm:$0xff] %v894
        %1023 = vst [vmem:[%s273 + $0x2e0] sm:$0xff] %v895
        %1024 = vst [vmem:[%s273 + $0x2e8] sm:$0xff] %v896
        %1025 = vst [vmem:[%s273 + $0x2f0] sm:$0xff] %v897
        %1026 = vst [vmem:[%s273 + $0x2f8] sm:$0xff] %v898
        %1027 = vst [vmem:[%s273 + $0x300] sm:$0xff] %v899
        %1028 = vst [vmem:[%s273 + $0x308] sm:$0xff] %v900
        %1029 = vst [vmem:[%s273 + $0x310] sm:$0xff] %v901
        %1030 = vst [vmem:[%s273 + $0x318] sm:$0xff] %v902
        %1031 = vst [vmem:[%s273 + $0x320] sm:$0xff] %v903
        %1032 = vst [vmem:[%s273 + $0x328] sm:$0xff] %v904
        %1033 = vst [vmem:[%s273 + $0x330] sm:$0xff] %v905
        %1034 = vst [vmem:[%s273 + $0x338] sm:$0xff] %v906
        %1035 = vst [vmem:[%s273 + $0x340] sm:$0xff] %v907
        %1036 = vst [vmem:[%s273 + $0x348] sm:$0xff] %v908
        %1037 = vst [vmem:[%s273 + $0x350] sm:$0xff] %v909
        %1038 = vst [vmem:[%s273 + $0x358] sm:$0xff] %v910
        %1039 = vst [vmem:[%s273 + $0x360] sm:$0xff] %v911
        %1040 = vst [vmem:[%s273 + $0x368] sm:$0xff] %v912
        %1041 = vst [vmem:[%s273 + $0x370] sm:$0xff] %v913
        %1042 = vst [vmem:[%s273 + $0x378] sm:$0xff] %v914
        %1043 = vst [vmem:[%s273 + $0x380] sm:$0xff] %v915
        %1044 = vst [vmem:[%s273 + $0x388] sm:$0xff] %v916
        %1045 = vst [vmem:[%s273 + $0x390] sm:$0xff] %v917
        %1046 = vst [vmem:[%s273 + $0x398] sm:$0xff] %v918
        %1047 = vst [vmem:[%s273 + $0x3a0] sm:$0xff] %v919
        %1048 = vst [vmem:[%s273 + $0x3a8] sm:$0xff] %v920
        %1049 = vst [vmem:[%s273 + $0x3b0] sm:$0xff] %v921
        %1050 = vst [vmem:[%s273 + $0x3b8] sm:$0xff] %v922
        %1051 = vst [vmem:[%s273 + $0x3c0] sm:$0xff] %v923
        %1052 = vst [vmem:[%s273 + $0x3c8] sm:$0xff] %v924
        %1053 = vst [vmem:[%s273 + $0x3d0] sm:$0xff] %v925
        %1054 = vst [vmem:[%s273 + $0x3d8] sm:$0xff] %v926
        %1055 = vst [vmem:[%s273 + $0x3e0] sm:$0xff] %v927
        %1056 = vst [vmem:[%s273 + $0x3e8] sm:$0xff] %v928
        %1057 = vst [vmem:[%s273 + $0x3f0] sm:$0xff] %v929
        %1058 = vst [vmem:[%s273 + $0x3f8] sm:$0xff] %v930
        %v1059 = vstv %s542
        %v1060 = vmul.f32 %v1059, %v285
        %v1061 = vmul.f32 %v1059, %v286
        %v1062 = vmul.f32 %v1059, %v287
        %v1063 = vmul.f32 %v1059, %v288
        %v1064 = vmul.f32 %v1059, %v289
        %v1065 = vmul.f32 %v1059, %v290
        %v1066 = vmul.f32 %v1059, %v291
        %v1067 = vmul.f32 %v1059, %v292
        %v1068 = vmul.f32 %v1059, %v293
        %v1069 = vmul.f32 %v1059, %v294
        %v1070 = vmul.f32 %v1059, %v295
        %v1071 = vmul.f32 %v1059, %v296
        %v1072 = vmul.f32 %v1059, %v297
        %v1073 = vmul.f32 %v1059, %v298
        %v1074 = vmul.f32 %v1059, %v299
        %v1075 = vmul.f32 %v1059, %v300
        %v1076 = vmul.f32 %v1059, %v301
        %v1077 = vmul.f32 %v1059, %v302
        %v1078 = vmul.f32 %v1059, %v303
        %v1079 = vmul.f32 %v1059, %v304
        %v1080 = vmul.f32 %v1059, %v305
        %v1081 = vmul.f32 %v1059, %v306
        %v1082 = vmul.f32 %v1059, %v307
        %v1083 = vmul.f32 %v1059, %v308
        %v1084 = vmul.f32 %v1059, %v309
        %v1085 = vmul.f32 %v1059, %v310
        %v1086 = vmul.f32 %v1059, %v311
        %v1087 = vmul.f32 %v1059, %v312
        %v1088 = vmul.f32 %v1059, %v313
        %v1089 = vmul.f32 %v1059, %v314
        %v1090 = vmul.f32 %v1059, %v315
        %v1091 = vmul.f32 %v1059, %v316
        %v1092 = vmul.f32 %v1059, %v317
        %v1093 = vmul.f32 %v1059, %v318
        %v1094 = vmul.f32 %v1059, %v319
        %v1095 = vmul.f32 %v1059, %v320
        %v1096 = vmul.f32 %v1059, %v321
        %v1097 = vmul.f32 %v1059, %v322
        %v1098 = vmul.f32 %v1059, %v323
        %v1099 = vmul.f32 %v1059, %v324
        %v1100 = vmul.f32 %v1059, %v325
        %v1101 = vmul.f32 %v1059, %v326
        %v1102 = vmul.f32 %v1059, %v327
        %v1103 = vmul.f32 %v1059, %v328
        %v1104 = vmul.f32 %v1059, %v329
        %v1105 = vmul.f32 %v1059, %v330
        %v1106 = vmul.f32 %v1059, %v331
        %v1107 = vmul.f32 %v1059, %v332
        %v1108 = vmul.f32 %v1059, %v333
        %v1109 = vmul.f32 %v1059, %v334
        %v1110 = vmul.f32 %v1059, %v335
        %v1111 = vmul.f32 %v1059, %v336
        %v1112 = vmul.f32 %v1059, %v337
        %v1113 = vmul.f32 %v1059, %v338
        %v1114 = vmul.f32 %v1059, %v339
        %v1115 = vmul.f32 %v1059, %v340
        %v1116 = vmul.f32 %v1059, %v341
        %v1117 = vmul.f32 %v1059, %v342
        %v1118 = vmul.f32 %v1059, %v343
        %v1119 = vmul.f32 %v1059, %v344
        %v1120 = vmul.f32 %v1059, %v345
        %v1121 = vmul.f32 %v1059, %v346
        %v1122 = vmul.f32 %v1059, %v347
        %v1123 = vmul.f32 %v1059, %v348
        %v1124 = vmul.f32 %v1059, %v349
        %v1125 = vmul.f32 %v1059, %v350
        %v1126 = vmul.f32 %v1059, %v351
        %v1127 = vmul.f32 %v1059, %v352
        %v1128 = vmul.f32 %v1059, %v353
        %v1129 = vmul.f32 %v1059, %v354
        %v1130 = vmul.f32 %v1059, %v355
        %v1131 = vmul.f32 %v1059, %v356
        %v1132 = vmul.f32 %v1059, %v357
        %v1133 = vmul.f32 %v1059, %v358
        %v1134 = vmul.f32 %v1059, %v359
        %v1135 = vmul.f32 %v1059, %v360
        %v1136 = vmul.f32 %v1059, %v361
        %v1137 = vmul.f32 %v1059, %v362
        %v1138 = vmul.f32 %v1059, %v363
        %v1139 = vmul.f32 %v1059, %v364
        %v1140 = vmul.f32 %v1059, %v365
        %v1141 = vmul.f32 %v1059, %v366
        %v1142 = vmul.f32 %v1059, %v367
        %v1143 = vmul.f32 %v1059, %v368
        %v1144 = vmul.f32 %v1059, %v369
        %v1145 = vmul.f32 %v1059, %v370
        %v1146 = vmul.f32 %v1059, %v371
        %v1147 = vmul.f32 %v1059, %v372
        %v1148 = vmul.f32 %v1059, %v373
        %v1149 = vmul.f32 %v1059, %v374
        %v1150 = vmul.f32 %v1059, %v375
        %v1151 = vmul.f32 %v1059, %v376
        %v1152 = vmul.f32 %v1059, %v377
        %v1153 = vmul.f32 %v1059, %v378
        %v1154 = vmul.f32 %v1059, %v379
        %v1155 = vmul.f32 %v1059, %v380
        %v1156 = vmul.f32 %v1059, %v381
        %v1157 = vmul.f32 %v1059, %v382
        %v1158 = vmul.f32 %v1059, %v383
        %v1159 = vmul.f32 %v1059, %v384
        %v1160 = vmul.f32 %v1059, %v385
        %v1161 = vmul.f32 %v1059, %v386
        %v1162 = vmul.f32 %v1059, %v387
        %v1163 = vmul.f32 %v1059, %v388
        %v1164 = vmul.f32 %v1059, %v389
        %v1165 = vmul.f32 %v1059, %v390
        %v1166 = vmul.f32 %v1059, %v391
        %v1167 = vmul.f32 %v1059, %v392
        %v1168 = vmul.f32 %v1059, %v393
        %v1169 = vmul.f32 %v1059, %v394
        %v1170 = vmul.f32 %v1059, %v395
        %v1171 = vmul.f32 %v1059, %v396
        %v1172 = vmul.f32 %v1059, %v397
        %v1173 = vmul.f32 %v1059, %v398
        %v1174 = vmul.f32 %v1059, %v399
        %v1175 = vmul.f32 %v1059, %v400
        %v1176 = vmul.f32 %v1059, %v401
        %v1177 = vmul.f32 %v1059, %v402
        %v1178 = vmul.f32 %v1059, %v403
        %v1179 = vmul.f32 %v1059, %v404
        %v1180 = vmul.f32 %v1059, %v405
        %v1181 = vmul.f32 %v1059, %v406
        %v1182 = vmul.f32 %v1059, %v407
        %v1183 = vmul.f32 %v1059, %v408
        %v1184 = vmul.f32 %v1059, %v409
        %v1185 = vmul.f32 %v1059, %v410
        %v1186 = vmul.f32 %v1059, %v411
        %v1187 = vmul.f32 %v1059, %v412
        %v1188 = vstv %s544
        %v1189 = vmul.f32 %v1188, %v413
        %v1190 = vmul.f32 %v1188, %v414
        %v1191 = vmul.f32 %v1188, %v415
        %v1192 = vmul.f32 %v1188, %v416
        %v1193 = vmul.f32 %v1188, %v417
        %v1194 = vmul.f32 %v1188, %v418
        %v1195 = vmul.f32 %v1188, %v419
        %v1196 = vmul.f32 %v1188, %v420
        %v1197 = vmul.f32 %v1188, %v421
        %v1198 = vmul.f32 %v1188, %v422
        %v1199 = vmul.f32 %v1188, %v423
        %v1200 = vmul.f32 %v1188, %v424
        %v1201 = vmul.f32 %v1188, %v425
        %v1202 = vmul.f32 %v1188, %v426
        %v1203 = vmul.f32 %v1188, %v427
        %v1204 = vmul.f32 %v1188, %v428
        %v1205 = vmul.f32 %v1188, %v429
        %v1206 = vmul.f32 %v1188, %v430
        %v1207 = vmul.f32 %v1188, %v431
        %v1208 = vmul.f32 %v1188, %v432
        %v1209 = vmul.f32 %v1188, %v433
        %v1210 = vmul.f32 %v1188, %v434
        %v1211 = vmul.f32 %v1188, %v435
        %v1212 = vmul.f32 %v1188, %v436
        %v1213 = vmul.f32 %v1188, %v437
        %v1214 = vmul.f32 %v1188, %v438
        %v1215 = vmul.f32 %v1188, %v439
        %v1216 = vmul.f32 %v1188, %v440
        %v1217 = vmul.f32 %v1188, %v441
        %v1218 = vmul.f32 %v1188, %v442
        %v1219 = vmul.f32 %v1188, %v443
        %v1220 = vmul.f32 %v1188, %v444
        %v1221 = vmul.f32 %v1188, %v445
        %v1222 = vmul.f32 %v1188, %v446
        %v1223 = vmul.f32 %v1188, %v447
        %v1224 = vmul.f32 %v1188, %v448
        %v1225 = vmul.f32 %v1188, %v449
        %v1226 = vmul.f32 %v1188, %v450
        %v1227 = vmul.f32 %v1188, %v451
        %v1228 = vmul.f32 %v1188, %v452
        %v1229 = vmul.f32 %v1188, %v453
        %v1230 = vmul.f32 %v1188, %v454
        %v1231 = vmul.f32 %v1188, %v455
        %v1232 = vmul.f32 %v1188, %v456
        %v1233 = vmul.f32 %v1188, %v457
        %v1234 = vmul.f32 %v1188, %v458
        %v1235 = vmul.f32 %v1188, %v459
        %v1236 = vmul.f32 %v1188, %v460
        %v1237 = vmul.f32 %v1188, %v461
        %v1238 = vmul.f32 %v1188, %v462
        %v1239 = vmul.f32 %v1188, %v463
        %v1240 = vmul.f32 %v1188, %v464
        %v1241 = vmul.f32 %v1188, %v465
        %v1242 = vmul.f32 %v1188, %v466
        %v1243 = vmul.f32 %v1188, %v467
        %v1244 = vmul.f32 %v1188, %v468
        %v1245 = vmul.f32 %v1188, %v469
        %v1246 = vmul.f32 %v1188, %v470
        %v1247 = vmul.f32 %v1188, %v471
        %v1248 = vmul.f32 %v1188, %v472
        %v1249 = vmul.f32 %v1188, %v473
        %v1250 = vmul.f32 %v1188, %v474
        %v1251 = vmul.f32 %v1188, %v475
        %v1252 = vmul.f32 %v1188, %v476
        %v1253 = vmul.f32 %v1188, %v477
        %v1254 = vmul.f32 %v1188, %v478
        %v1255 = vmul.f32 %v1188, %v479
        %v1256 = vmul.f32 %v1188, %v480
        %v1257 = vmul.f32 %v1188, %v481
        %v1258 = vmul.f32 %v1188, %v482
        %v1259 = vmul.f32 %v1188, %v483
        %v1260 = vmul.f32 %v1188, %v484
        %v1261 = vmul.f32 %v1188, %v485
        %v1262 = vmul.f32 %v1188, %v486
        %v1263 = vmul.f32 %v1188, %v487
        %v1264 = vmul.f32 %v1188, %v488
        %v1265 = vmul.f32 %v1188, %v489
        %v1266 = vmul.f32 %v1188, %v490
        %v1267 = vmul.f32 %v1188, %v491
        %v1268 = vmul.f32 %v1188, %v492
        %v1269 = vmul.f32 %v1188, %v493
        %v1270 = vmul.f32 %v1188, %v494
        %v1271 = vmul.f32 %v1188, %v495
        %v1272 = vmul.f32 %v1188, %v496
        %v1273 = vmul.f32 %v1188, %v497
        %v1274 = vmul.f32 %v1188, %v498
        %v1275 = vmul.f32 %v1188, %v499
        %v1276 = vmul.f32 %v1188, %v500
        %v1277 = vmul.f32 %v1188, %v501
        %v1278 = vmul.f32 %v1188, %v502
        %v1279 = vmul.f32 %v1188, %v503
        %v1280 = vmul.f32 %v1188, %v504
        %v1281 = vmul.f32 %v1188, %v505
        %v1282 = vmul.f32 %v1188, %v506
        %v1283 = vmul.f32 %v1188, %v507
        %v1284 = vmul.f32 %v1188, %v508
        %v1285 = vmul.f32 %v1188, %v509
        %v1286 = vmul.f32 %v1188, %v510
        %v1287 = vmul.f32 %v1188, %v511
        %v1288 = vmul.f32 %v1188, %v512
        %v1289 = vmul.f32 %v1188, %v513
        %v1290 = vmul.f32 %v1188, %v514
        %v1291 = vmul.f32 %v1188, %v515
        %v1292 = vmul.f32 %v1188, %v516
        %v1293 = vmul.f32 %v1188, %v517
        %v1294 = vmul.f32 %v1188, %v518
        %v1295 = vmul.f32 %v1188, %v519
        %v1296 = vmul.f32 %v1188, %v520
        %v1297 = vmul.f32 %v1188, %v521
        %v1298 = vmul.f32 %v1188, %v522
        %v1299 = vmul.f32 %v1188, %v523
        %v1300 = vmul.f32 %v1188, %v524
        %v1301 = vmul.f32 %v1188, %v525
        %v1302 = vmul.f32 %v1188, %v526
        %v1303 = vmul.f32 %v1188, %v527
        %v1304 = vmul.f32 %v1188, %v528
        %v1305 = vmul.f32 %v1188, %v529
        %v1306 = vmul.f32 %v1188, %v530
        %v1307 = vmul.f32 %v1188, %v531
        %v1308 = vmul.f32 %v1188, %v532
        %v1309 = vmul.f32 %v1188, %v533
        %v1310 = vmul.f32 %v1188, %v534
        %v1311 = vmul.f32 %v1188, %v535
        %v1312 = vmul.f32 %v1188, %v536
        %v1313 = vmul.f32 %v1188, %v537
        %v1314 = vmul.f32 %v1188, %v538
        %v1315 = vmul.f32 %v1188, %v539
        %v1316 = vmul.f32 %v1188, %v540
        %v1317 = vadd.f32 %v1060, %v1189
        %v1318 = vadd.f32 %v1061, %v1190
        %v1319 = vadd.f32 %v1062, %v1191
        %v1320 = vadd.f32 %v1063, %v1192
        %v1321 = vadd.f32 %v1064, %v1193
        %v1322 = vadd.f32 %v1065, %v1194
        %v1323 = vadd.f32 %v1066, %v1195
        %v1324 = vadd.f32 %v1067, %v1196
        %v1325 = vadd.f32 %v1068, %v1197
        %v1326 = vadd.f32 %v1069, %v1198
        %v1327 = vadd.f32 %v1070, %v1199
        %v1328 = vadd.f32 %v1071, %v1200
        %v1329 = vadd.f32 %v1072, %v1201
        %v1330 = vadd.f32 %v1073, %v1202
        %v1331 = vadd.f32 %v1074, %v1203
        %v1332 = vadd.f32 %v1075, %v1204
        %v1333 = vadd.f32 %v1076, %v1205
        %v1334 = vadd.f32 %v1077, %v1206
        %v1335 = vadd.f32 %v1078, %v1207
        %v1336 = vadd.f32 %v1079, %v1208
        %v1337 = vadd.f32 %v1080, %v1209
        %v1338 = vadd.f32 %v1081, %v1210
        %v1339 = vadd.f32 %v1082, %v1211
        %v1340 = vadd.f32 %v1083, %v1212
        %v1341 = vadd.f32 %v1084, %v1213
        %v1342 = vadd.f32 %v1085, %v1214
        %v1343 = vadd.f32 %v1086, %v1215
        %v1344 = vadd.f32 %v1087, %v1216
        %v1345 = vadd.f32 %v1088, %v1217
        %v1346 = vadd.f32 %v1089, %v1218
        %v1347 = vadd.f32 %v1090, %v1219
        %v1348 = vadd.f32 %v1091, %v1220
        %v1349 = vadd.f32 %v1092, %v1221
        %v1350 = vadd.f32 %v1093, %v1222
        %v1351 = vadd.f32 %v1094, %v1223
        %v1352 = vadd.f32 %v1095, %v1224
        %v1353 = vadd.f32 %v1096, %v1225
        %v1354 = vadd.f32 %v1097, %v1226
        %v1355 = vadd.f32 %v1098, %v1227
        %v1356 = vadd.f32 %v1099, %v1228
        %v1357 = vadd.f32 %v1100, %v1229
        %v1358 = vadd.f32 %v1101, %v1230
        %v1359 = vadd.f32 %v1102, %v1231
        %v1360 = vadd.f32 %v1103, %v1232
        %v1361 = vadd.f32 %v1104, %v1233
        %v1362 = vadd.f32 %v1105, %v1234
        %v1363 = vadd.f32 %v1106, %v1235
        %v1364 = vadd.f32 %v1107, %v1236
        %v1365 = vadd.f32 %v1108, %v1237
        %v1366 = vadd.f32 %v1109, %v1238
        %v1367 = vadd.f32 %v1110, %v1239
        %v1368 = vadd.f32 %v1111, %v1240
        %v1369 = vadd.f32 %v1112, %v1241
        %v1370 = vadd.f32 %v1113, %v1242
        %v1371 = vadd.f32 %v1114, %v1243
        %v1372 = vadd.f32 %v1115, %v1244
        %v1373 = vadd.f32 %v1116, %v1245
        %v1374 = vadd.f32 %v1117, %v1246
        %v1375 = vadd.f32 %v1118, %v1247
        %v1376 = vadd.f32 %v1119, %v1248
        %v1377 = vadd.f32 %v1120, %v1249
        %v1378 = vadd.f32 %v1121, %v1250
        %v1379 = vadd.f32 %v1122, %v1251
        %v1380 = vadd.f32 %v1123, %v1252
        %v1381 = vadd.f32 %v1124, %v1253
        %v1382 = vadd.f32 %v1125, %v1254
        %v1383 = vadd.f32 %v1126, %v1255
        %v1384 = vadd.f32 %v1127, %v1256
        %v1385 = vadd.f32 %v1128, %v1257
        %v1386 = vadd.f32 %v1129, %v1258
        %v1387 = vadd.f32 %v1130, %v1259
        %v1388 = vadd.f32 %v1131, %v1260
        %v1389 = vadd.f32 %v1132, %v1261
        %v1390 = vadd.f32 %v1133, %v1262
        %v1391 = vadd.f32 %v1134, %v1263
        %v1392 = vadd.f32 %v1135, %v1264
        %v1393 = vadd.f32 %v1136, %v1265
        %v1394 = vadd.f32 %v1137, %v1266
        %v1395 = vadd.f32 %v1138, %v1267
        %v1396 = vadd.f32 %v1139, %v1268
        %v1397 = vadd.f32 %v1140, %v1269
        %v1398 = vadd.f32 %v1141, %v1270
        %v1399 = vadd.f32 %v1142, %v1271
        %v1400 = vadd.f32 %v1143, %v1272
        %v1401 = vadd.f32 %v1144, %v1273
        %v1402 = vadd.f32 %v1145, %v1274
        %v1403 = vadd.f32 %v1146, %v1275
        %v1404 = vadd.f32 %v1147, %v1276
        %v1405 = vadd.f32 %v1148, %v1277
        %v1406 = vadd.f32 %v1149, %v1278
        %v1407 = vadd.f32 %v1150, %v1279
        %v1408 = vadd.f32 %v1151, %v1280
        %v1409 = vadd.f32 %v1152, %v1281
        %v1410 = vadd.f32 %v1153, %v1282
        %v1411 = vadd.f32 %v1154, %v1283
        %v1412 = vadd.f32 %v1155, %v1284
        %v1413 = vadd.f32 %v1156, %v1285
        %v1414 = vadd.f32 %v1157, %v1286
        %v1415 = vadd.f32 %v1158, %v1287
        %v1416 = vadd.f32 %v1159, %v1288
        %v1417 = vadd.f32 %v1160, %v1289
        %v1418 = vadd.f32 %v1161, %v1290
        %v1419 = vadd.f32 %v1162, %v1291
        %v1420 = vadd.f32 %v1163, %v1292
        %v1421 = vadd.f32 %v1164, %v1293
        %v1422 = vadd.f32 %v1165, %v1294
        %v1423 = vadd.f32 %v1166, %v1295
        %v1424 = vadd.f32 %v1167, %v1296
        %v1425 = vadd.f32 %v1168, %v1297
        %v1426 = vadd.f32 %v1169, %v1298
        %v1427 = vadd.f32 %v1170, %v1299
        %v1428 = vadd.f32 %v1171, %v1300
        %v1429 = vadd.f32 %v1172, %v1301
        %v1430 = vadd.f32 %v1173, %v1302
        %v1431 = vadd.f32 %v1174, %v1303
        %v1432 = vadd.f32 %v1175, %v1304
        %v1433 = vadd.f32 %v1176, %v1305
        %v1434 = vadd.f32 %v1177, %v1306
        %v1435 = vadd.f32 %v1178, %v1307
        %v1436 = vadd.f32 %v1179, %v1308
        %v1437 = vadd.f32 %v1180, %v1309
        %v1438 = vadd.f32 %v1181, %v1310
        %v1439 = vadd.f32 %v1182, %v1311
        %v1440 = vadd.f32 %v1183, %v1312
        %v1441 = vadd.f32 %v1184, %v1313
        %v1442 = vadd.f32 %v1185, %v1314
        %v1443 = vadd.f32 %v1186, %v1315
        %v1444 = vadd.f32 %v1187, %v1316
        %1445 = vst [vmem:[%s280] sm:$0xff] %v1317
        %1446 = vst [vmem:[%s280 + $0x8] sm:$0xff] %v1318
        %1447 = vst [vmem:[%s280 + $0x10] sm:$0xff] %v1319
        %1448 = vst [vmem:[%s280 + $0x18] sm:$0xff] %v1320
        %1449 = vst [vmem:[%s280 + $0x20] sm:$0xff] %v1321
        %1450 = vst [vmem:[%s280 + $0x28] sm:$0xff] %v1322
        %1451 = vst [vmem:[%s280 + $0x30] sm:$0xff] %v1323
        %1452 = vst [vmem:[%s280 + $0x38] sm:$0xff] %v1324
        %1453 = vst [vmem:[%s280 + $0x40] sm:$0xff] %v1325
        %1454 = vst [vmem:[%s280 + $0x48] sm:$0xff] %v1326
        %1455 = vst [vmem:[%s280 + $0x50] sm:$0xff] %v1327
        %1456 = vst [vmem:[%s280 + $0x58] sm:$0xff] %v1328
        %1457 = vst [vmem:[%s280 + $0x60] sm:$0xff] %v1329
        %1458 = vst [vmem:[%s280 + $0x68] sm:$0xff] %v1330
        %1459 = vst [vmem:[%s280 + $0x70] sm:$0xff] %v1331
        %1460 = vst [vmem:[%s280 + $0x78] sm:$0xff] %v1332
        %1461 = vst [vmem:[%s280 + $0x80] sm:$0xff] %v1333
        %1462 = vst [vmem:[%s280 + $0x88] sm:$0xff] %v1334
        %1463 = vst [vmem:[%s280 + $0x90] sm:$0xff] %v1335
        %1464 = vst [vmem:[%s280 + $0x98] sm:$0xff] %v1336
        %1465 = vst [vmem:[%s280 + $0xa0] sm:$0xff] %v1337
        %1466 = vst [vmem:[%s280 + $0xa8] sm:$0xff] %v1338
        %1467 = vst [vmem:[%s280 + $0xb0] sm:$0xff] %v1339
        %1468 = vst [vmem:[%s280 + $0xb8] sm:$0xff] %v1340
        %1469 = vst [vmem:[%s280 + $0xc0] sm:$0xff] %v1341
        %1470 = vst [vmem:[%s280 + $0xc8] sm:$0xff] %v1342
        %1471 = vst [vmem:[%s280 + $0xd0] sm:$0xff] %v1343
        %1472 = vst [vmem:[%s280 + $0xd8] sm:$0xff] %v1344
        %1473 = vst [vmem:[%s280 + $0xe0] sm:$0xff] %v1345
        %1474 = vst [vmem:[%s280 + $0xe8] sm:$0xff] %v1346
        %1475 = vst [vmem:[%s280 + $0xf0] sm:$0xff] %v1347
        %1476 = vst [vmem:[%s280 + $0xf8] sm:$0xff] %v1348
        %1477 = vst [vmem:[%s280 + $0x100] sm:$0xff] %v1349
        %1478 = vst [vmem:[%s280 + $0x108] sm:$0xff] %v1350
        %1479 = vst [vmem:[%s280 + $0x110] sm:$0xff] %v1351
        %1480 = vst [vmem:[%s280 + $0x118] sm:$0xff] %v1352
        %1481 = vst [vmem:[%s280 + $0x120] sm:$0xff] %v1353
        %1482 = vst [vmem:[%s280 + $0x128] sm:$0xff] %v1354
        %1483 = vst [vmem:[%s280 + $0x130] sm:$0xff] %v1355
        %1484 = vst [vmem:[%s280 + $0x138] sm:$0xff] %v1356
        %1485 = vst [vmem:[%s280 + $0x140] sm:$0xff] %v1357
        %1486 = vst [vmem:[%s280 + $0x148] sm:$0xff] %v1358
        %1487 = vst [vmem:[%s280 + $0x150] sm:$0xff] %v1359
        %1488 = vst [vmem:[%s280 + $0x158] sm:$0xff] %v1360
        %1489 = vst [vmem:[%s280 + $0x160] sm:$0xff] %v1361
        %1490 = vst [vmem:[%s280 + $0x168] sm:$0xff] %v1362
        %1491 = vst [vmem:[%s280 + $0x170] sm:$0xff] %v1363
        %1492 = vst [vmem:[%s280 + $0x178] sm:$0xff] %v1364
        %1493 = vst [vmem:[%s280 + $0x180] sm:$0xff] %v1365
        %1494 = vst [vmem:[%s280 + $0x188] sm:$0xff] %v1366
        %1495 = vst [vmem:[%s280 + $0x190] sm:$0xff] %v1367
        %1496 = vst [vmem:[%s280 + $0x198] sm:$0xff] %v1368
        %1497 = vst [vmem:[%s280 + $0x1a0] sm:$0xff] %v1369
        %1498 = vst [vmem:[%s280 + $0x1a8] sm:$0xff] %v1370
        %1499 = vst [vmem:[%s280 + $0x1b0] sm:$0xff] %v1371
        %1500 = vst [vmem:[%s280 + $0x1b8] sm:$0xff] %v1372
        %1501 = vst [vmem:[%s280 + $0x1c0] sm:$0xff] %v1373
        %1502 = vst [vmem:[%s280 + $0x1c8] sm:$0xff] %v1374
        %1503 = vst [vmem:[%s280 + $0x1d0] sm:$0xff] %v1375
        %1504 = vst [vmem:[%s280 + $0x1d8] sm:$0xff] %v1376
        %1505 = vst [vmem:[%s280 + $0x1e0] sm:$0xff] %v1377
        %1506 = vst [vmem:[%s280 + $0x1e8] sm:$0xff] %v1378
        %1507 = vst [vmem:[%s280 + $0x1f0] sm:$0xff] %v1379
        %1508 = vst [vmem:[%s280 + $0x1f8] sm:$0xff] %v1380
        %1509 = vst [vmem:[%s280 + $0x200] sm:$0xff] %v1381
        %1510 = vst [vmem:[%s280 + $0x208] sm:$0xff] %v1382
        %1511 = vst [vmem:[%s280 + $0x210] sm:$0xff] %v1383
        %1512 = vst [vmem:[%s280 + $0x218] sm:$0xff] %v1384
        %1513 = vst [vmem:[%s280 + $0x220] sm:$0xff] %v1385
        %1514 = vst [vmem:[%s280 + $0x228] sm:$0xff] %v1386
        %1515 = vst [vmem:[%s280 + $0x230] sm:$0xff] %v1387
        %1516 = vst [vmem:[%s280 + $0x238] sm:$0xff] %v1388
        %1517 = vst [vmem:[%s280 + $0x240] sm:$0xff] %v1389
        %1518 = vst [vmem:[%s280 + $0x248] sm:$0xff] %v1390
        %1519 = vst [vmem:[%s280 + $0x250] sm:$0xff] %v1391
        %1520 = vst [vmem:[%s280 + $0x258] sm:$0xff] %v1392
        %1521 = vst [vmem:[%s280 + $0x260] sm:$0xff] %v1393
        %1522 = vst [vmem:[%s280 + $0x268] sm:$0xff] %v1394
        %1523 = vst [vmem:[%s280 + $0x270] sm:$0xff] %v1395
        %1524 = vst [vmem:[%s280 + $0x278] sm:$0xff] %v1396
        %1525 = vst [vmem:[%s280 + $0x280] sm:$0xff] %v1397
        %1526 = vst [vmem:[%s280 + $0x288] sm:$0xff] %v1398
        %1527 = vst [vmem:[%s280 + $0x290] sm:$0xff] %v1399
        %1528 = vst [vmem:[%s280 + $0x298] sm:$0xff] %v1400
        %1529 = vst [vmem:[%s280 + $0x2a0] sm:$0xff] %v1401
        %1530 = vst [vmem:[%s280 + $0x2a8] sm:$0xff] %v1402
        %1531 = vst [vmem:[%s280 + $0x2b0] sm:$0xff] %v1403
        %1532 = vst [vmem:[%s280 + $0x2b8] sm:$0xff] %v1404
        %1533 = vst [vmem:[%s280 + $0x2c0] sm:$0xff] %v1405
        %1534 = vst [vmem:[%s280 + $0x2c8] sm:$0xff] %v1406
        %1535 = vst [vmem:[%s280 + $0x2d0] sm:$0xff] %v1407
        %1536 = vst [vmem:[%s280 + $0x2d8] sm:$0xff] %v1408
        %1537 = vst [vmem:[%s280 + $0x2e0] sm:$0xff] %v1409
        %1538 = vst [vmem:[%s280 + $0x2e8] sm:$0xff] %v1410
        %1539 = vst [vmem:[%s280 + $0x2f0] sm:$0xff] %v1411
        %1540 = vst [vmem:[%s280 + $0x2f8] sm:$0xff] %v1412
        %1541 = vst [vmem:[%s280 + $0x300] sm:$0xff] %v1413
        %1542 = vst [vmem:[%s280 + $0x308] sm:$0xff] %v1414
        %1543 = vst [vmem:[%s280 + $0x310] sm:$0xff] %v1415
        %1544 = vst [vmem:[%s280 + $0x318] sm:$0xff] %v1416
        %1545 = vst [vmem:[%s280 + $0x320] sm:$0xff] %v1417
        %1546 = vst [vmem:[%s280 + $0x328] sm:$0xff] %v1418
        %1547 = vst [vmem:[%s280 + $0x330] sm:$0xff] %v1419
        %1548 = vst [vmem:[%s280 + $0x338] sm:$0xff] %v1420
        %1549 = vst [vmem:[%s280 + $0x340] sm:$0xff] %v1421
        %1550 = vst [vmem:[%s280 + $0x348] sm:$0xff] %v1422
        %1551 = vst [vmem:[%s280 + $0x350] sm:$0xff] %v1423
        %1552 = vst [vmem:[%s280 + $0x358] sm:$0xff] %v1424
        %1553 = vst [vmem:[%s280 + $0x360] sm:$0xff] %v1425
        %1554 = vst [vmem:[%s280 + $0x368] sm:$0xff] %v1426
        %1555 = vst [vmem:[%s280 + $0x370] sm:$0xff] %v1427
        %1556 = vst [vmem:[%s280 + $0x378] sm:$0xff] %v1428
        %1557 = vst [vmem:[%s280 + $0x380] sm:$0xff] %v1429
        %1558 = vst [vmem:[%s280 + $0x388] sm:$0xff] %v1430
        %1559 = vst [vmem:[%s280 + $0x390] sm:$0xff] %v1431
        %1560 = vst [vmem:[%s280 + $0x398] sm:$0xff] %v1432
        %1561 = vst [vmem:[%s280 + $0x3a0] sm:$0xff] %v1433
        %1562 = vst [vmem:[%s280 + $0x3a8] sm:$0xff] %v1434
        %1563 = vst [vmem:[%s280 + $0x3b0] sm:$0xff] %v1435
        %1564 = vst [vmem:[%s280 + $0x3b8] sm:$0xff] %v1436
        %1565 = vst [vmem:[%s280 + $0x3c0] sm:$0xff] %v1437
        %1566 = vst [vmem:[%s280 + $0x3c8] sm:$0xff] %v1438
        %1567 = vst [vmem:[%s280 + $0x3d0] sm:$0xff] %v1439
        %1568 = vst [vmem:[%s280 + $0x3d8] sm:$0xff] %v1440
        %1569 = vst [vmem:[%s280 + $0x3e0] sm:$0xff] %v1441
        %1570 = vst [vmem:[%s280 + $0x3e8] sm:$0xff] %v1442
        %1571 = vst [vmem:[%s280 + $0x3f0] sm:$0xff] %v1443
        %1572 = vst [vmem:[%s280 + $0x3f8] sm:$0xff] %v1444
        %s1573 = sand.u32 %s110, 1
        %s1574 = scalar_lea.sflag [#allocation4], %s1573
        %s1575 = sand.u32 %s110, 1
        %s1576 = smul.addr %s1575, 1024
        %s1577 = scalar_lea.vmem [#allocation9], %s1576
        %s1578 = sand.u32 %s136, 1
        %s1579 = scalar_lea.sflag [#allocation11], %s1578
        %s1580 = sand.u32 %s136, 1
        %s1581 = smul.addr %s1580, 1024
        %s1582 = scalar_lea.vmem [#allocation10], %s1581
        // Predicated region
        $region45: #{tpu_custom_call.1} parent=31 // pred_check
          %p1583 = pneg %p120
        $region46: #{tpu_custom_call.1} parent=31 // pred_check_branch
          %1585 = sbr.rel (%p1583) target = $region48
        $region47: #{tpu_custom_call.1} parent=31 // pred_region
          %s1586 = smul.u32 4, %s29
          %s1588 = ssub.s32 16384, 16384
          %1589 = vsyncadd %s1574, %s1588
          %s1590 = smul.addr %s1586, 32
          %s1591 = smul.addr %s1590, 128
          %s1592 = scalar_lea.hbm %s3, %s1591
          %s1593 = sshll.u32 %s1577, 4
          %s1594 = int_to_ptr.vmem [resolvable:$true] %s1593
          %1599 = dma.vmem_to_hbm [thread:$0]  %s1594, 16384, %s1592, %s1574, 4096, 4096, 256
        $region48: #{tpu_custom_call.1} parent=31 // pred_fallthru
          _
        // Predicated region
        $region49: #{tpu_custom_call.1} parent=31 // pred_check
          %p1600 = pneg %p146
        $region50: #{tpu_custom_call.1} parent=31 // pred_check_branch
          %1602 = sbr.rel (%p1600) target = $region52
        $region51: #{tpu_custom_call.1} parent=31 // pred_region
          %s1603 = smul.u32 4, %s29
          %s1605 = ssub.s32 16384, 16384
          %1606 = vsyncadd %s1579, %s1605
          %s1607 = smul.addr %s1603, 32
          %s1608 = smul.addr %s1607, 128
          %s1609 = scalar_lea.hbm %s4, %s1608
          %s1610 = sshll.u32 %s1582, 4
          %s1611 = int_to_ptr.vmem [resolvable:$true] %s1610
          %1616 = dma.vmem_to_hbm [thread:$0]  %s1611, 16384, %s1609, %s1579, 4096, 4096, 256
        $region52: #{tpu_custom_call.1} parent=31 // pred_fallthru
          _
      $region32: #{tpu_custom_call.1} parent=5 // pred_fallthru
        _
      %p1617 = scmp.le.s32.totalorder 2, %s24
      // Predicated region
      $region53: #{tpu_custom_call.1} parent=5 // pred_check
        %p1618 = pneg %p1617
      $region54: #{tpu_custom_call.1} parent=5 // pred_check_branch
        %1620 = sbr.rel (%p1618) target = $region56
      $region55: #{tpu_custom_call.1} parent=5 // pred_region
        %s1621 = ssub.s32 %s24, 2
        // Predicated region
        $region57: #{tpu_custom_call.1} parent=55 // pred_check
          %p1622 = pneg %p126
        $region58: #{tpu_custom_call.1} parent=55 // pred_check_branch
          %1624 = sbr.rel (%p1622) target = $region60
        $region59: #{tpu_custom_call.1} parent=55 // pred_region
          %s1625 = sand.u32 %s111, 1
          %s1626 = scalar_lea.sflag [#allocation4], %s1625
          %s1627 = sand.u32 %s111, 1
          %s1628 = smul.addr %s1627, 1024
          %s1629 = scalar_lea.vmem [#allocation9], %s1628
          %1630 = dma.done %s1626, 16384
        $region60: #{tpu_custom_call.1} parent=55 // pred_fallthru
          _
        // Predicated region
        $region61: #{tpu_custom_call.1} parent=55 // pred_check
          %p1631 = pneg %p152
        $region62: #{tpu_custom_call.1} parent=55 // pred_check_branch
          %1633 = sbr.rel (%p1631) target = $region64
        $region63: #{tpu_custom_call.1} parent=55 // pred_region
          %s1634 = sand.u32 %s137, 1
          %s1635 = scalar_lea.sflag [#allocation11], %s1634
          %s1636 = sand.u32 %s137, 1
          %s1637 = smul.addr %s1636, 1024
          %s1638 = scalar_lea.vmem [#allocation10], %s1637
          %1639 = dma.done %s1635, 16384
        $region64: #{tpu_custom_call.1} parent=55 // pred_fallthru
          _
      $region56: #{tpu_custom_call.1} parent=5 // pred_fallthru
        _
    $region6: #{tpu_custom_call.1} parent=1 // loop_footer
      %s28 = sadd.s32 1, %s24
    $region7: #{tpu_custom_call.1} parent=1 // loop_footer_branch
      %23 = sbr.rel target = $region3
    $region8: #{tpu_custom_call.1} parent=1 // loop_exit
      _
    %1640 = vsyncpa [#allocation3], 1
    %s1641 = scalar_lea.sflag [#allocation3], 1
    %1642 = vsyncpa %s1641, 1
    %1643 = vsyncpa [#allocation8], 1
    %s1644 = scalar_lea.sflag [#allocation8], 1
    %1645 = vsyncpa %s1644, 1
    %1646 = vsyncpa [#allocation4], 1
    %s1647 = scalar_lea.sflag [#allocation4], 1
    %1648 = vsyncpa %s1647, 1
    %1649 = vsyncpa [#allocation11], 1
    %s1650 = scalar_lea.sflag [#allocation11], 1
    %1651 = vsyncpa %s1650, 1
    %1652 = vsyncpa [#allocation5], 1
    %s1653 = scalar_lea.sflag [#allocation5], 1
    %1654 = vsyncpa %s1653, 1

</llo_original>
